<compile_context>
chip_gen: v7x
topology: tpu7x:2x2x1
jax: 0.10.0
libtpu: 0.0.40
codegen_flags: <defaults>
</compile_context>

<pallas_src>
import functools

import jax
import jax.numpy as jnp
from jax import lax
from jax.experimental import pallas as pl
from jax.experimental.pallas import tpu as pltpu


def _round_up(x, m):
    return ((x + m - 1) // m) * m


def _gru_encoder_kernel(x_ref, wih_ref, whh_ref, bih_ref, bhh_ref,
                        w1_ref, b1_ref, w2_ref, b2_ref,
                        out_ref, gi_scr, *, t_steps, b_pad, run_backwards):
    hp = whh_ref.shape[0]                       # padded GRU width (per gate)
    dn = (((1,), (0,)), ((), ()))               # standard [in,out] contraction

    # ---- hoisted input projection (off the recurrence critical path) -------
    # (T*B_pad, D) @ (D, 3*Hp) -> VMEM scratch (T*B_pad, 3*Hp)
    gi_scr[...] = (
        lax.dot_general(x_ref[...], wih_ref[...], dn,
                        preferred_element_type=jnp.float32)
        + bih_ref[...])

    # ---- GRU recurrence: h carried as a loop value (one vreg) --------------
    def step(t, h):
        idx = (t_steps - 1 - t) if run_backwards else t     # fold time reverse
        row0 = pl.multiple_of(idx * b_pad, b_pad)            # aligned sublane slice
        gi = gi_scr[pl.ds(row0, b_pad), :]                    # (B_pad, 3*Hp)
        gh = lax.dot_general(h, whh_ref[...], dn,
                             preferred_element_type=jnp.float32) + bhh_ref[...]
        # PyTorch GRU gate order r, z, n ; n uses r * (W_hn h + b_hn).
        # Gates are lane-aligned 128-wide blocks -> slice-free vreg cuts.
        r = jax.nn.sigmoid(gi[:, 0:hp] + gh[:, 0:hp])
        z = jax.nn.sigmoid(gi[:, hp:2 * hp] + gh[:, hp:2 * hp])
        n = jnp.tanh(gi[:, 2 * hp:3 * hp] + r * gh[:, 2 * hp:3 * hp])
        return (1.0 - z) * n + z * h

    h_last = lax.fori_loop(0, t_steps, step,
                           jnp.zeros((b_pad, hp), jnp.float32), unroll=True)

    # ---- MLP head (runs once) ----------------------------------------------
    hid = jnp.tanh(lax.dot_general(h_last, w1_ref[...], dn,
                                   preferred_element_type=jnp.float32)
                   + b1_ref[...])
    out = lax.dot_general(hid, w2_ref[...], dn,
                          preferred_element_type=jnp.float32) + b2_ref[...]
    out_ref[...] = out.astype(out_ref.dtype)


def _pad_gate_cols(w_t, h, hp):
    """[in, 3H] -> [in, 3*Hp]: pad each gate's columns to a full lane block."""
    parts = [jnp.pad(w_t[:, g * h:(g + 1) * h], ((0, 0), (0, hp - h)))
             for g in range(3)]
    return jnp.concatenate(parts, axis=1)


def _build_inputs(data, time_steps, run_backwards, use_delta_t, b_pad):
    """Build x in FORWARD time order (reverse is folded into the kernel loop)."""
    B, T, _ = data.shape
    x = jnp.transpose(data, (1, 0, 2))                       # [T, B, Din]
    if use_delta_t:
        dt = time_steps[1:] - time_steps[:-1]
        zero = jnp.zeros((1,), dt.dtype)
        # forward-order dt such that consuming x at index (T-1-t) reproduces the
        # PyTorch reversed sequence (and plain order when run_backwards=False).
        dt_fwd = jnp.concatenate([zero, dt]) if run_backwards \
            else jnp.concatenate([dt, zero])
        dt_feat = jnp.broadcast_to(dt_fwd[:, None, None], (T, B, 1)).astype(x.dtype)
        x = jnp.concatenate([dt_feat, x], axis=-1)           # delta_t FIRST feature
    if b_pad > B:
        x = jnp.pad(x, ((0, 0), (0, b_pad - B), (0, 0)))
    return x.reshape(T * b_pad, x.shape[-1])                 # (T*B_pad, D)


def encoder_z0_rnn_forward(data, time_steps, params,
                           run_backwards=True, use_delta_t=True):
    """Pallas implementation of Encoder_z0_RNN.forward.

    data:       [n_traj, T, input_dim] float32
    time_steps: [T] float32
    returns (mean, std), each [1, n_traj, latent_dim]
    """
    B, T, _ = data.shape
    b_pad = _round_up(max(B, 8), 8)
    x = _build_inputs(data, time_steps, run_backwards, use_delta_t, b_pad)
    D = x.shape[-1]

    w_ih, w_hh = params["w_ih"], params["w_hh"]          # (3H, D), (3H, H)
    b_ih, b_hh = params["b_ih"], params["b_hh"]          # (3H,), (3H,)
    w1, b1 = params["w1"], params["b1"]                  # (50, H), (50,)
    w2, b2 = params["w2"], params["b2"]                  # (2L, 50), (2L,)

    H = w_ih.shape[0] // 3
    H1 = w1.shape[0]
    L2 = w2.shape[0]
    L = L2 // 2

    # lane-padded sizes (per-gate padding -> slice-free gate extraction)
    Hp = _round_up(H, 128)
    H1p = _round_up(H1, 128)
    L2p = _round_up(L2, 128)

    # One-time wrapper-side transposes to [in, out] + gate/lane padding.
    wih_p = _pad_gate_cols(w_ih.T, H, Hp)                              # (D,   3Hp)
    whh_p = jnp.pad(_pad_gate_cols(w_hh.T, H, Hp), ((0, Hp - H), (0, 0)))  # (Hp, 3Hp)
    bih_p = _pad_gate_cols(b_ih[None, :], H, Hp)                        # (1,  3Hp)
    bhh_p = _pad_gate_cols(b_hh[None, :], H, Hp)                        # (1,  3Hp)
    w1_p = jnp.pad(w1.T, ((0, Hp - H), (0, H1p - H1)))                  # (Hp, H1p)
    b1_p = jnp.pad(b1[None, :], ((0, 0), (0, H1p - H1)))                # (1,  H1p)
    w2_p = jnp.pad(w2.T, ((0, H1p - H1), (0, L2p - L2)))                # (H1p, L2p)
    b2_p = jnp.pad(b2[None, :], ((0, 0), (0, L2p - L2)))                # (1,  L2p)

    flops = (2 * T * b_pad * D * 3 * Hp
             + 2 * T * b_pad * Hp * 3 * Hp
             + 2 * b_pad * (Hp * H1p + H1p * L2p))
    transcendentals = T * b_pad * 3 * Hp + b_pad * H1p
    bytes_accessed = 4 * (T * b_pad * D + D * 3 * Hp + Hp * 3 * Hp + 6 * Hp
                          + Hp * H1p + H1p + H1p * L2p + L2p + b_pad * L2p)

    kernel = functools.partial(_gru_encoder_kernel, t_steps=T, b_pad=b_pad,
                               run_backwards=run_backwards)

    vmem = pl.BlockSpec(memory_space=pltpu.MemorySpace.VMEM)
    out = pl.pallas_call(
        kernel,
        out_shape=jax.ShapeDtypeStruct((b_pad, L2p), jnp.float32),
        in_specs=[vmem] * 9,
        out_specs=vmem,
        scratch_shapes=[pltpu.VMEM((T * b_pad, 3 * Hp), jnp.float32)],  # GI
        compiler_params=pltpu.CompilerParams(vmem_limit_bytes=32 * 1024 * 1024),
        cost_estimate=pl.CostEstimate(
            flops=int(flops),
            transcendentals=int(transcendentals),
            bytes_accessed=int(bytes_accessed)),
    )(x, wih_p, whh_p, bih_p, bhh_p, w1_p, b1_p, w2_p, b2_p)

    out = out[:B, :L2]
    mean = out[:, :L]
    std = jnp.abs(out[:, L:])
    return mean[None], std[None]


def init_encoder_params(key, input_dim, latent_dim, gru_hidden=20, use_delta_t=True):
    """GRU params (PyTorch uniform init) + hiddens_to_z0 (N(0, 0.1), bias=0)."""
    D = input_dim + (1 if use_delta_t else 0)
    H = gru_hidden
    k = jax.random.split(key, 6)
    s = float(H) ** -0.5
    w_ih = jax.random.uniform(k[0], (3 * H, D), jnp.float32, -s, s)
    w_hh = jax.random.uniform(k[1], (3 * H, H), jnp.float32, -s, s)
    b_ih = jax.random.uniform(k[2], (3 * H,), jnp.float32, -s, s)
    b_hh = jax.random.uniform(k[3], (3 * H,), jnp.float32, -s, s)
    w1 = 0.1 * jax.random.normal(k[4], (50, H), jnp.float32)
    b1 = jnp.zeros((50,), jnp.float32)
    w2 = 0.1 * jax.random.normal(k[5], (2 * latent_dim, 50), jnp.float32)
    b2 = jnp.zeros((2 * latent_dim,), jnp.float32)
    return dict(w_ih=w_ih, w_hh=w_hh, b_ih=b_ih, b_hh=b_hh,
                w1=w1, b1=b1, w2=w2, b2=b2)


def _reference_forward(data, time_steps, params,
                       run_backwards=True, use_delta_t=True):
    """Pure-JAX reference that mirrors the PyTorch code line-by-line."""
    B, T, _ = data.shape
    x = jnp.transpose(data, (1, 0, 2))                 # [T, B, Din]
    if run_backwards:
        x = x[::-1]
    if use_delta_t:
        dt = time_steps[1:] - time_steps[:-1]
        if run_backwards:
            dt = dt[::-1]
        dt = jnp.concatenate([dt, jnp.zeros((1,), dt.dtype)])
        dt = jnp.broadcast_to(dt[:, None, None], (T, B, 1)).astype(x.dtype)
        x = jnp.concatenate([dt, x], axis=-1)

    w_ih, w_hh = params["w_ih"], params["w_hh"]
    b_ih, b_hh = params["b_ih"], params["b_hh"]
    H = w_ih.shape[0] // 3
    L = params["w2"].shape[0] // 2
    hp = lax.Precision.HIGHEST

    def cell(h, x_t):
        gi = jnp.dot(x_t, w_ih.T, precision=hp) + b_ih
        gh = jnp.dot(h, w_hh.T, precision=hp) + b_hh
        r = jax.nn.sigmoid(gi[:, :H] + gh[:, :H])
        z = jax.nn.sigmoid(gi[:, H:2 * H] + gh[:, H:2 * H])
        n = jnp.tanh(gi[:, 2 * H:] + r * gh[:, 2 * H:])
        h = (1.0 - z) * n + z * h
        return h, None

    h0 = jnp.zeros((B, H), jnp.float32)
    h_last, _ = lax.scan(cell, h0, x)
    hid = jnp.tanh(jnp.dot(h_last, params["w1"].T, precision=hp) + params["b1"])
    out = jnp.dot(hid, params["w2"].T, precision=hp) + params["b2"]
    return out[:, :L][None], jnp.abs(out[:, L:])[None]


if __name__ == "__main__":
    latent_dim = 10
    input_dim = 16
    gru_hidden = 20
    n_traj, T = 4, 8

    key = jax.random.PRNGKey(0)
    kd, kt, kp = jax.random.split(key, 3)

    data = jax.random.normal(kd, (n_traj, T, input_dim), jnp.float32)
    time_steps = jnp.sort(jax.random.uniform(kt, (T,), jnp.float32))
    params = init_encoder_params(kp, input_dim, latent_dim, gru_hidden)

    mean, std = encoder_z0_rnn_forward(data, time_steps, params)
    jax.block_until_ready((mean, std))

    mean_ref, std_ref = _reference_forward(data, time_steps, params)

    assert mean.shape == (1, n_traj, latent_dim)
    assert std.shape == (1, n_traj, latent_dim)
    assert not bool(jnp.isnan(mean).any()) and not bool(jnp.isnan(std).any())
    assert jnp.allclose(mean, mean_ref, atol=1e-4, rtol=1e-4)
    assert jnp.allclose(std, std_ref, atol=1e-4, rtol=1e-4)

    # also exercise the run_backwards=False path once
    mean_f, std_f = encoder_z0_rnn_forward(data, time_steps, params,
                                           run_backwards=False)
    mean_fr, std_fr = _reference_forward(data, time_steps, params,
                                         run_backwards=False)
    assert jnp.allclose(mean_f, mean_fr, atol=1e-4, rtol=1e-4)
    assert jnp.allclose(std_f, std_fr, atol=1e-4, rtol=1e-4)

    print("KERNEL_OK")
</pallas_src>

<mosaic_0001>
module attributes {stable_mosaic.version = 11 : i64} {
  func.func @_gru_encoder_kernel(%arg0: memref<64x17xf32, #tpu.memory_space<vmem>>, %arg1: memref<17x384xf32, #tpu.memory_space<vmem>>, %arg2: memref<128x384xf32, #tpu.memory_space<vmem>>, %arg3: memref<1x384xf32, #tpu.memory_space<vmem>>, %arg4: memref<1x384xf32, #tpu.memory_space<vmem>>, %arg5: memref<128x128xf32, #tpu.memory_space<vmem>>, %arg6: memref<1x128xf32, #tpu.memory_space<vmem>>, %arg7: memref<128x128xf32, #tpu.memory_space<vmem>>, %arg8: memref<1x128xf32, #tpu.memory_space<vmem>>, %arg9: memref<8x128xf32, #tpu.memory_space<vmem>>, %arg10: memref<64x384xf32, #tpu.memory_space<vmem>>) attributes {dimension_semantics = [], scalar_prefetch = 0 : i64, scratch_operands = 1 : i64, tpu.core_type = #tpu.core_type<tc>} {
    %c0 = arith.constant 0 : index
    %c0_0 = arith.constant 0 : index
    %0 = vector.load %arg0[%c0, %c0_0] : memref<64x17xf32, #tpu.memory_space<vmem>>, vector<64x17xf32>
    %c0_1 = arith.constant 0 : index
    %c0_2 = arith.constant 0 : index
    %1 = vector.load %arg1[%c0_1, %c0_2] : memref<17x384xf32, #tpu.memory_space<vmem>>, vector<17x384xf32>
    %cst = arith.constant dense<0.000000e+00> : vector<64x384xf32>
    %2 = tpu.matmul %0, %1, %cst {dimension_numbers = #tpu.dot_dimension_numbers<[1], [0], [0], [1], [0, 0, 1, 1], [], []>} : vector<64x17xf32>, vector<17x384xf32>, vector<64x384xf32> -> vector<64x384xf32>
    %c0_3 = arith.constant 0 : index
    %c0_4 = arith.constant 0 : index
    %3 = vector.load %arg3[%c0_3, %c0_4] : memref<1x384xf32, #tpu.memory_space<vmem>>, vector<1x384xf32>
    %4 = vector.broadcast %3 : vector<1x384xf32> to vector<64x384xf32>
    %5 = arith.addf %2, %4 : vector<64x384xf32>
    %c0_5 = arith.constant 0 : index
    %c0_6 = arith.constant 0 : index
    %6 = vector.load %arg10[%c0_5, %c0_6] : memref<64x384xf32, #tpu.memory_space<vmem>>, vector<64x384xf32>
    tpu.vector_store %arg10[%c0_5, %c0_6], %5 {strides = array<i32>} : memref<64x384xf32, #tpu.memory_space<vmem>>, vector<64x384xf32>,
    %cst_7 = arith.constant 0.000000e+00 : f32
    %7 = vector.broadcast %cst_7 : f32 to vector<8x128xf32>
    %c0_i32 = arith.constant 0 : i32
    %c7_i32 = arith.constant 7 : i32
    %8 = arith.subi %c7_i32, %c0_i32 : i32
    %c8_i32 = arith.constant 8 : i32
    %9 = arith.muli %8, %c8_i32 : i32
    %10 = tpu.assume_multiple %9, 8 : i32
    %11 = arith.index_cast %10 : i32 to index
    %c0_8 = arith.constant 0 : index
    %12 = vector.load %arg10[%11, %c0_8] : memref<64x384xf32, #tpu.memory_space<vmem>>, vector<8x384xf32>
    %c0_9 = arith.constant 0 : index
    %c0_10 = arith.constant 0 : index
    %13 = vector.load %arg2[%c0_9, %c0_10] : memref<128x384xf32, #tpu.memory_space<vmem>>, vector<128x384xf32>
    %cst_11 = arith.constant dense<0.000000e+00> : vector<8x384xf32>
    %14 = tpu.matmul %7, %13, %cst_11 {dimension_numbers = #tpu.dot_dimension_numbers<[1], [0], [0], [1], [0, 0, 1, 1], [], []>} : vector<8x128xf32>, vector<128x384xf32>, vector<8x384xf32> -> vector<8x384xf32>
    %c0_12 = arith.constant 0 : index
    %c0_13 = arith.constant 0 : index
    %15 = vector.load %arg4[%c0_12, %c0_13] : memref<1x384xf32, #tpu.memory_space<vmem>>, vector<1x384xf32>
    %16 = vector.broadcast %15 : vector<1x384xf32> to vector<8x384xf32>
    %17 = arith.addf %14, %16 : vector<8x384xf32>
    %18 = vector.extract_strided_slice %12 {offsets = [0, 0], sizes = [8, 128], strides = [1, 1]} : vector<8x384xf32> to vector<8x128xf32>
    %19 = vector.extract_strided_slice %17 {offsets = [0, 0], sizes = [8, 128], strides = [1, 1]} : vector<8x384xf32> to vector<8x128xf32>
    %20 = arith.addf %18, %19 : vector<8x128xf32>
    %21 = arith.negf %20 : vector<8x128xf32>
    %22 = math.exp %21 : vector<8x128xf32>
    %cst_14 = arith.constant 1.000000e+00 : f32
    %23 = vector.broadcast %cst_14 : f32 to vector<8x128xf32>
    %24 = arith.addf %23, %22 : vector<8x128xf32>
    %25 = arith.divf %23, %24 : vector<8x128xf32>
    %26 = vector.extract_strided_slice %12 {offsets = [0, 128], sizes = [8, 128], strides = [1, 1]} : vector<8x384xf32> to vector<8x128xf32>
    %27 = vector.extract_strided_slice %17 {offsets = [0, 128], sizes = [8, 128], strides = [1, 1]} : vector<8x384xf32> to vector<8x128xf32>
    %28 = arith.addf %26, %27 : vector<8x128xf32>
    %29 = arith.negf %28 : vector<8x128xf32>
    %30 = math.exp %29 : vector<8x128xf32>
    %cst_15 = arith.constant 1.000000e+00 : f32
    %31 = vector.broadcast %cst_15 : f32 to vector<8x128xf32>
    %32 = arith.addf %31, %30 : vector<8x128xf32>
    %33 = arith.divf %31, %32 : vector<8x128xf32>
    %34 = vector.extract_strided_slice %12 {offsets = [0, 256], sizes = [8, 128], strides = [1, 1]} : vector<8x384xf32> to vector<8x128xf32>
    %35 = vector.extract_strided_slice %17 {offsets = [0, 256], sizes = [8, 128], strides = [1, 1]} : vector<8x384xf32> to vector<8x128xf32>
    %36 = arith.mulf %25, %35 : vector<8x128xf32>
    %37 = arith.addf %34, %36 : vector<8x128xf32>
    %38 = math.tanh %37 : vector<8x128xf32>
    %cst_16 = arith.constant 1.000000e+00 : f32
    %39 = vector.broadcast %cst_16 : f32 to vector<8x128xf32>
    %40 = arith.subf %39, %33 : vector<8x128xf32>
    %41 = arith.mulf %40, %38 : vector<8x128xf32>
    %42 = arith.mulf %33, %7 : vector<8x128xf32>
    %43 = arith.addf %41, %42 : vector<8x128xf32>
    %c1_i32 = arith.constant 1 : i32
    %c7_i32_17 = arith.constant 7 : i32
    %44 = arith.subi %c7_i32_17, %c1_i32 : i32
    %c8_i32_18 = arith.constant 8 : i32
    %45 = arith.muli %44, %c8_i32_18 : i32
    %46 = tpu.assume_multiple %45, 8 : i32
    %47 = arith.index_cast %46 : i32 to index
    %c0_19 = arith.constant 0 : index
    %48 = vector.load %arg10[%47, %c0_19] : memref<64x384xf32, #tpu.memory_space<vmem>>, vector<8x384xf32>
    %c0_20 = arith.constant 0 : index
    %c0_21 = arith.constant 0 : index
    %49 = vector.load %arg2[%c0_20, %c0_21] : memref<128x384xf32, #tpu.memory_space<vmem>>, vector<128x384xf32>
    %cst_22 = arith.constant dense<0.000000e+00> : vector<8x384xf32>
    %50 = tpu.matmul %43, %49, %cst_22 {dimension_numbers = #tpu.dot_dimension_numbers<[1], [0], [0], [1], [0, 0, 1, 1], [], []>} : vector<8x128xf32>, vector<128x384xf32>, vector<8x384xf32> -> vector<8x384xf32>
    %c0_23 = arith.constant 0 : index
    %c0_24 = arith.constant 0 : index
    %51 = vector.load %arg4[%c0_23, %c0_24] : memref<1x384xf32, #tpu.memory_space<vmem>>, vector<1x384xf32>
    %52 = vector.broadcast %51 : vector<1x384xf32> to vector<8x384xf32>
    %53 = arith.addf %50, %52 : vector<8x384xf32>
    %54 = vector.extract_strided_slice %48 {offsets = [0, 0], sizes = [8, 128], strides = [1, 1]} : vector<8x384xf32> to vector<8x128xf32>
    %55 = vector.extract_strided_slice %53 {offsets = [0, 0], sizes = [8, 128], strides = [1, 1]} : vector<8x384xf32> to vector<8x128xf32>
    %56 = arith.addf %54, %55 : vector<8x128xf32>
    %57 = arith.negf %56 : vector<8x128xf32>
    %58 = math.exp %57 : vector<8x128xf32>
    %cst_25 = arith.constant 1.000000e+00 : f32
    %59 = vector.broadcast %cst_25 : f32 to vector<8x128xf32>
    %60 = arith.addf %59, %58 : vector<8x128xf32>
    %61 = arith.divf %59, %60 : vector<8x128xf32>
    %62 = vector.extract_strided_slice %48 {offsets = [0, 128], sizes = [8, 128], strides = [1, 1]} : vector<8x384xf32> to vector<8x128xf32>
    %63 = vector.extract_strided_slice %53 {offsets = [0, 128], sizes = [8, 128], strides = [1, 1]} : vector<8x384xf32> to vector<8x128xf32>
    %64 = arith.addf %62, %63 : vector<8x128xf32>
    %65 = arith.negf %64 : vector<8x128xf32>
    %66 = math.exp %65 : vector<8x128xf32>
    %cst_26 = arith.constant 1.000000e+00 : f32
    %67 = vector.broadcast %cst_26 : f32 to vector<8x128xf32>
    %68 = arith.addf %67, %66 : vector<8x128xf32>
    %69 = arith.divf %67, %68 : vector<8x128xf32>
    %70 = vector.extract_strided_slice %48 {offsets = [0, 256], sizes = [8, 128], strides = [1, 1]} : vector<8x384xf32> to vector<8x128xf32>
    %71 = vector.extract_strided_slice %53 {offsets = [0, 256], sizes = [8, 128], strides = [1, 1]} : vector<8x384xf32> to vector<8x128xf32>
    %72 = arith.mulf %61, %71 : vector<8x128xf32>
    %73 = arith.addf %70, %72 : vector<8x128xf32>
    %74 = math.tanh %73 : vector<8x128xf32>
    %cst_27 = arith.constant 1.000000e+00 : f32
    %75 = vector.broadcast %cst_27 : f32 to vector<8x128xf32>
    %76 = arith.subf %75, %69 : vector<8x128xf32>
    %77 = arith.mulf %76, %74 : vector<8x128xf32>
    %78 = arith.mulf %69, %43 : vector<8x128xf32>
    %79 = arith.addf %77, %78 : vector<8x128xf32>
    %c2_i32 = arith.constant 2 : i32
    %c7_i32_28 = arith.constant 7 : i32
    %80 = arith.subi %c7_i32_28, %c2_i32 : i32
    %c8_i32_29 = arith.constant 8 : i32
    %81 = arith.muli %80, %c8_i32_29 : i32
    %82 = tpu.assume_multiple %81, 8 : i32
    %83 = arith.index_cast %82 : i32 to index
    %c0_30 = arith.constant 0 : index
    %84 = vector.load %arg10[%83, %c0_30] : memref<64x384xf32, #tpu.memory_space<vmem>>, vector<8x384xf32>
    %c0_31 = arith.constant 0 : index
    %c0_32 = arith.constant 0 : index
    %85 = vector.load %arg2[%c0_31, %c0_32] : memref<128x384xf32, #tpu.memory_space<vmem>>, vector<128x384xf32>
    %cst_33 = arith.constant dense<0.000000e+00> : vector<8x384xf32>
    %86 = tpu.matmul %79, %85, %cst_33 {dimension_numbers = #tpu.dot_dimension_numbers<[1], [0], [0], [1], [0, 0, 1, 1], [], []>} : vector<8x128xf32>, vector<128x384xf32>, vector<8x384xf32> -> vector<8x384xf32>
    %c0_34 = arith.constant 0 : index
    %c0_35 = arith.constant 0 : index
    %87 = vector.load %arg4[%c0_34, %c0_35] : memref<1x384xf32, #tpu.memory_space<vmem>>, vector<1x384xf32>
    %88 = vector.broadcast %87 : vector<1x384xf32> to vector<8x384xf32>
    %89 = arith.addf %86, %88 : vector<8x384xf32>
    %90 = vector.extract_strided_slice %84 {offsets = [0, 0], sizes = [8, 128], strides = [1, 1]} : vector<8x384xf32> to vector<8x128xf32>
    %91 = vector.extract_strided_slice %89 {offsets = [0, 0], sizes = [8, 128], strides = [1, 1]} : vector<8x384xf32> to vector<8x128xf32>
    %92 = arith.addf %90, %91 : vector<8x128xf32>
    %93 = arith.negf %92 : vector<8x128xf32>
    %94 = math.exp %93 : vector<8x128xf32>
    %cst_36 = arith.constant 1.000000e+00 : f32
    %95 = vector.broadcast %cst_36 : f32 to vector<8x128xf32>
    %96 = arith.addf %95, %94 : vector<8x128xf32>
    %97 = arith.divf %95, %96 : vector<8x128xf32>
    %98 = vector.extract_strided_slice %84 {offsets = [0, 128], sizes = [8, 128], strides = [1, 1]} : vector<8x384xf32> to vector<8x128xf32>
    %99 = vector.extract_strided_slice %89 {offsets = [0, 128], sizes = [8, 128], strides = [1, 1]} : vector<8x384xf32> to vector<8x128xf32>
    %100 = arith.addf %98, %99 : vector<8x128xf32>
    %101 = arith.negf %100 : vector<8x128xf32>
    %102 = math.exp %101 : vector<8x128xf32>
    %cst_37 = arith.constant 1.000000e+00 : f32
    %103 = vector.broadcast %cst_37 : f32 to vector<8x128xf32>
    %104 = arith.addf %103, %102 : vector<8x128xf32>
    %105 = arith.divf %103, %104 : vector<8x128xf32>
    %106 = vector.extract_strided_slice %84 {offsets = [0, 256], sizes = [8, 128], strides = [1, 1]} : vector<8x384xf32> to vector<8x128xf32>
    %107 = vector.extract_strided_slice %89 {offsets = [0, 256], sizes = [8, 128], strides = [1, 1]} : vector<8x384xf32> to vector<8x128xf32>
    %108 = arith.mulf %97, %107 : vector<8x128xf32>
    %109 = arith.addf %106, %108 : vector<8x128xf32>
    %110 = math.tanh %109 : vector<8x128xf32>
    %cst_38 = arith.constant 1.000000e+00 : f32
    %111 = vector.broadcast %cst_38 : f32 to vector<8x128xf32>
    %112 = arith.subf %111, %105 : vector<8x128xf32>
    %113 = arith.mulf %112, %110 : vector<8x128xf32>
    %114 = arith.mulf %105, %79 : vector<8x128xf32>
    %115 = arith.addf %113, %114 : vector<8x128xf32>
    %c3_i32 = arith.constant 3 : i32
    %c7_i32_39 = arith.constant 7 : i32
    %116 = arith.subi %c7_i32_39, %c3_i32 : i32
    %c8_i32_40 = arith.constant 8 : i32
    %117 = arith.muli %116, %c8_i32_40 : i32
    %118 = tpu.assume_multiple %117, 8 : i32
    %119 = arith.index_cast %118 : i32 to index
    %c0_41 = arith.constant 0 : index
    %120 = vector.load %arg10[%119, %c0_41] : memref<64x384xf32, #tpu.memory_space<vmem>>, vector<8x384xf32>
    %c0_42 = arith.constant 0 : index
    %c0_43 = arith.constant 0 : index
    %121 = vector.load %arg2[%c0_42, %c0_43] : memref<128x384xf32, #tpu.memory_space<vmem>>, vector<128x384xf32>
    %cst_44 = arith.constant dense<0.000000e+00> : vector<8x384xf32>
    %122 = tpu.matmul %115, %121, %cst_44 {dimension_numbers = #tpu.dot_dimension_numbers<[1], [0], [0], [1], [0, 0, 1, 1], [], []>} : vector<8x128xf32>, vector<128x384xf32>, vector<8x384xf32> -> vector<8x384xf32>
    %c0_45 = arith.constant 0 : index
    %c0_46 = arith.constant 0 : index
    %123 = vector.load %arg4[%c0_45, %c0_46] : memref<1x384xf32, #tpu.memory_space<vmem>>, vector<1x384xf32>
    %124 = vector.broadcast %123 : vector<1x384xf32> to vector<8x384xf32>
    %125 = arith.addf %122, %124 : vector<8x384xf32>
    %126 = vector.extract_strided_slice %120 {offsets = [0, 0], sizes = [8, 128], strides = [1, 1]} : vector<8x384xf32> to vector<8x128xf32>
    %127 = vector.extract_strided_slice %125 {offsets = [0, 0], sizes = [8, 128], strides = [1, 1]} : vector<8x384xf32> to vector<8x128xf32>
    %128 = arith.addf %126, %127 : vector<8x128xf32>
    %129 = arith.negf %128 : vector<8x128xf32>
    %130 = math.exp %129 : vector<8x128xf32>
    %cst_47 = arith.constant 1.000000e+00 : f32
    %131 = vector.broadcast %cst_47 : f32 to vector<8x128xf32>
    %132 = arith.addf %131, %130 : vector<8x128xf32>
    %133 = arith.divf %131, %132 : vector<8x128xf32>
    %134 = vector.extract_strided_slice %120 {offsets = [0, 128], sizes = [8, 128], strides = [1, 1]} : vector<8x384xf32> to vector<8x128xf32>
    %135 = vector.extract_strided_slice %125 {offsets = [0, 128], sizes = [8, 128], strides = [1, 1]} : vector<8x384xf32> to vector<8x128xf32>
    %136 = arith.addf %134, %135 : vector<8x128xf32>
    %137 = arith.negf %136 : vector<8x128xf32>
    %138 = math.exp %137 : vector<8x128xf32>
    %cst_48 = arith.constant 1.000000e+00 : f32
    %139 = vector.broadcast %cst_48 : f32 to vector<8x128xf32>
    %140 = arith.addf %139, %138 : vector<8x128xf32>
    %141 = arith.divf %139, %140 : vector<8x128xf32>
    %142 = vector.extract_strided_slice %120 {offsets = [0, 256], sizes = [8, 128], strides = [1, 1]} : vector<8x384xf32> to vector<8x128xf32>
    %143 = vector.extract_strided_slice %125 {offsets = [0, 256], sizes = [8, 128], strides = [1, 1]} : vector<8x384xf32> to vector<8x128xf32>
    %144 = arith.mulf %133, %143 : vector<8x128xf32>
    %145 = arith.addf %142, %144 : vector<8x128xf32>
    %146 = math.tanh %145 : vector<8x128xf32>
    %cst_49 = arith.constant 1.000000e+00 : f32
    %147 = vector.broadcast %cst_49 : f32 to vector<8x128xf32>
    %148 = arith.subf %147, %141 : vector<8x128xf32>
    %149 = arith.mulf %148, %146 : vector<8x128xf32>
    %150 = arith.mulf %141, %115 : vector<8x128xf32>
    %151 = arith.addf %149, %150 : vector<8x128xf32>
    %c4_i32 = arith.constant 4 : i32
    %c7_i32_50 = arith.constant 7 : i32
    %152 = arith.subi %c7_i32_50, %c4_i32 : i32
    %c8_i32_51 = arith.constant 8 : i32
    %153 = arith.muli %152, %c8_i32_51 : i32
    %154 = tpu.assume_multiple %153, 8 : i32
    %155 = arith.index_cast %154 : i32 to index
    %c0_52 = arith.constant 0 : index
    %156 = vector.load %arg10[%155, %c0_52] : memref<64x384xf32, #tpu.memory_space<vmem>>, vector<8x384xf32>
    %c0_53 = arith.constant 0 : index
    %c0_54 = arith.constant 0 : index
    %157 = vector.load %arg2[%c0_53, %c0_54] : memref<128x384xf32, #tpu.memory_space<vmem>>, vector<128x384xf32>
    %cst_55 = arith.constant dense<0.000000e+00> : vector<8x384xf32>
    %158 = tpu.matmul %151, %157, %cst_55 {dimension_numbers = #tpu.dot_dimension_numbers<[1], [0], [0], [1], [0, 0, 1, 1], [], []>} : vector<8x128xf32>, vector<128x384xf32>, vector<8x384xf32> -> vector<8x384xf32>
    %c0_56 = arith.constant 0 : index
    %c0_57 = arith.constant 0 : index
    %159 = vector.load %arg4[%c0_56, %c0_57] : memref<1x384xf32, #tpu.memory_space<vmem>>, vector<1x384xf32>
    %160 = vector.broadcast %159 : vector<1x384xf32> to vector<8x384xf32>
    %161 = arith.addf %158, %160 : vector<8x384xf32>
    %162 = vector.extract_strided_slice %156 {offsets = [0, 0], sizes = [8, 128], strides = [1, 1]} : vector<8x384xf32> to vector<8x128xf32>
    %163 = vector.extract_strided_slice %161 {offsets = [0, 0], sizes = [8, 128], strides = [1, 1]} : vector<8x384xf32> to vector<8x128xf32>
    %164 = arith.addf %162, %163 : vector<8x128xf32>
    %165 = arith.negf %164 : vector<8x128xf32>
    %166 = math.exp %165 : vector<8x128xf32>
    %cst_58 = arith.constant 1.000000e+00 : f32
    %167 = vector.broadcast %cst_58 : f32 to vector<8x128xf32>
    %168 = arith.addf %167, %166 : vector<8x128xf32>
    %169 = arith.divf %167, %168 : vector<8x128xf32>
    %170 = vector.extract_strided_slice %156 {offsets = [0, 128], sizes = [8, 128], strides = [1, 1]} : vector<8x384xf32> to vector<8x128xf32>
    %171 = vector.extract_strided_slice %161 {offsets = [0, 128], sizes = [8, 128], strides = [1, 1]} : vector<8x384xf32> to vector<8x128xf32>
    %172 = arith.addf %170, %171 : vector<8x128xf32>
    %173 = arith.negf %172 : vector<8x128xf32>
    %174 = math.exp %173 : vector<8x128xf32>
    %cst_59 = arith.constant 1.000000e+00 : f32
    %175 = vector.broadcast %cst_59 : f32 to vector<8x128xf32>
    %176 = arith.addf %175, %174 : vector<8x128xf32>
    %177 = arith.divf %175, %176 : vector<8x128xf32>
    %178 = vector.extract_strided_slice %156 {offsets = [0, 256], sizes = [8, 128], strides = [1, 1]} : vector<8x384xf32> to vector<8x128xf32>
    %179 = vector.extract_strided_slice %161 {offsets = [0, 256], sizes = [8, 128], strides = [1, 1]} : vector<8x384xf32> to vector<8x128xf32>
    %180 = arith.mulf %169, %179 : vector<8x128xf32>
    %181 = arith.addf %178, %180 : vector<8x128xf32>
    %182 = math.tanh %181 : vector<8x128xf32>
    %cst_60 = arith.constant 1.000000e+00 : f32
    %183 = vector.broadcast %cst_60 : f32 to vector<8x128xf32>
    %184 = arith.subf %183, %177 : vector<8x128xf32>
    %185 = arith.mulf %184, %182 : vector<8x128xf32>
    %186 = arith.mulf %177, %151 : vector<8x128xf32>
    %187 = arith.addf %185, %186 : vector<8x128xf32>
    %c5_i32 = arith.constant 5 : i32
    %c7_i32_61 = arith.constant 7 : i32
    %188 = arith.subi %c7_i32_61, %c5_i32 : i32
    %c8_i32_62 = arith.constant 8 : i32
    %189 = arith.muli %188, %c8_i32_62 : i32
    %190 = tpu.assume_multiple %189, 8 : i32
    %191 = arith.index_cast %190 : i32 to index
    %c0_63 = arith.constant 0 : index
    %192 = vector.load %arg10[%191, %c0_63] : memref<64x384xf32, #tpu.memory_space<vmem>>, vector<8x384xf32>
    %c0_64 = arith.constant 0 : index
    %c0_65 = arith.constant 0 : index
    %193 = vector.load %arg2[%c0_64, %c0_65] : memref<128x384xf32, #tpu.memory_space<vmem>>, vector<128x384xf32>
    %cst_66 = arith.constant dense<0.000000e+00> : vector<8x384xf32>
    %194 = tpu.matmul %187, %193, %cst_66 {dimension_numbers = #tpu.dot_dimension_numbers<[1], [0], [0], [1], [0, 0, 1, 1], [], []>} : vector<8x128xf32>, vector<128x384xf32>, vector<8x384xf32> -> vector<8x384xf32>
    %c0_67 = arith.constant 0 : index
    %c0_68 = arith.constant 0 : index
    %195 = vector.load %arg4[%c0_67, %c0_68] : memref<1x384xf32, #tpu.memory_space<vmem>>, vector<1x384xf32>
    %196 = vector.broadcast %195 : vector<1x384xf32> to vector<8x384xf32>
    %197 = arith.addf %194, %196 : vector<8x384xf32>
    %198 = vector.extract_strided_slice %192 {offsets = [0, 0], sizes = [8, 128], strides = [1, 1]} : vector<8x384xf32> to vector<8x128xf32>
    %199 = vector.extract_strided_slice %197 {offsets = [0, 0], sizes = [8, 128], strides = [1, 1]} : vector<8x384xf32> to vector<8x128xf32>
    %200 = arith.addf %198, %199 : vector<8x128xf32>
    %201 = arith.negf %200 : vector<8x128xf32>
    %202 = math.exp %201 : vector<8x128xf32>
    %cst_69 = arith.constant 1.000000e+00 : f32
    %203 = vector.broadcast %cst_69 : f32 to vector<8x128xf32>
    %204 = arith.addf %203, %202 : vector<8x128xf32>
    %205 = arith.divf %203, %204 : vector<8x128xf32>
    %206 = vector.extract_strided_slice %192 {offsets = [0, 128], sizes = [8, 128], strides = [1, 1]} : vector<8x384xf32> to vector<8x128xf32>
    %207 = vector.extract_strided_slice %197 {offsets = [0, 128], sizes = [8, 128], strides = [1, 1]} : vector<8x384xf32> to vector<8x128xf32>
    %208 = arith.addf %206, %207 : vector<8x128xf32>
    %209 = arith.negf %208 : vector<8x128xf32>
    %210 = math.exp %209 : vector<8x128xf32>
    %cst_70 = arith.constant 1.000000e+00 : f32
    %211 = vector.broadcast %cst_70 : f32 to vector<8x128xf32>
    %212 = arith.addf %211, %210 : vector<8x128xf32>
    %213 = arith.divf %211, %212 : vector<8x128xf32>
    %214 = vector.extract_strided_slice %192 {offsets = [0, 256], sizes = [8, 128], strides = [1, 1]} : vector<8x384xf32> to vector<8x128xf32>
    %215 = vector.extract_strided_slice %197 {offsets = [0, 256], sizes = [8, 128], strides = [1, 1]} : vector<8x384xf32> to vector<8x128xf32>
    %216 = arith.mulf %205, %215 : vector<8x128xf32>
    %217 = arith.addf %214, %216 : vector<8x128xf32>
    %218 = math.tanh %217 : vector<8x128xf32>
    %cst_71 = arith.constant 1.000000e+00 : f32
    %219 = vector.broadcast %cst_71 : f32 to vector<8x128xf32>
    %220 = arith.subf %219, %213 : vector<8x128xf32>
    %221 = arith.mulf %220, %218 : vector<8x128xf32>
    %222 = arith.mulf %213, %187 : vector<8x128xf32>
    %223 = arith.addf %221, %222 : vector<8x128xf32>
    %c6_i32 = arith.constant 6 : i32
    %c7_i32_72 = arith.constant 7 : i32
    %224 = arith.subi %c7_i32_72, %c6_i32 : i32
    %c8_i32_73 = arith.constant 8 : i32
    %225 = arith.muli %224, %c8_i32_73 : i32
    %226 = tpu.assume_multiple %225, 8 : i32
    %227 = arith.index_cast %226 : i32 to index
    %c0_74 = arith.constant 0 : index
    %228 = vector.load %arg10[%227, %c0_74] : memref<64x384xf32, #tpu.memory_space<vmem>>, vector<8x384xf32>
    %c0_75 = arith.constant 0 : index
    %c0_76 = arith.constant 0 : index
    %229 = vector.load %arg2[%c0_75, %c0_76] : memref<128x384xf32, #tpu.memory_space<vmem>>, vector<128x384xf32>
    %cst_77 = arith.constant dense<0.000000e+00> : vector<8x384xf32>
    %230 = tpu.matmul %223, %229, %cst_77 {dimension_numbers = #tpu.dot_dimension_numbers<[1], [0], [0], [1], [0, 0, 1, 1], [], []>} : vector<8x128xf32>, vector<128x384xf32>, vector<8x384xf32> -> vector<8x384xf32>
    %c0_78 = arith.constant 0 : index
    %c0_79 = arith.constant 0 : index
    %231 = vector.load %arg4[%c0_78, %c0_79] : memref<1x384xf32, #tpu.memory_space<vmem>>, vector<1x384xf32>
    %232 = vector.broadcast %231 : vector<1x384xf32> to vector<8x384xf32>
    %233 = arith.addf %230, %232 : vector<8x384xf32>
    %234 = vector.extract_strided_slice %228 {offsets = [0, 0], sizes = [8, 128], strides = [1, 1]} : vector<8x384xf32> to vector<8x128xf32>
    %235 = vector.extract_strided_slice %233 {offsets = [0, 0], sizes = [8, 128], strides = [1, 1]} : vector<8x384xf32> to vector<8x128xf32>
    %236 = arith.addf %234, %235 : vector<8x128xf32>
    %237 = arith.negf %236 : vector<8x128xf32>
    %238 = math.exp %237 : vector<8x128xf32>
    %cst_80 = arith.constant 1.000000e+00 : f32
    %239 = vector.broadcast %cst_80 : f32 to vector<8x128xf32>
    %240 = arith.addf %239, %238 : vector<8x128xf32>
    %241 = arith.divf %239, %240 : vector<8x128xf32>
    %242 = vector.extract_strided_slice %228 {offsets = [0, 128], sizes = [8, 128], strides = [1, 1]} : vector<8x384xf32> to vector<8x128xf32>
    %243 = vector.extract_strided_slice %233 {offsets = [0, 128], sizes = [8, 128], strides = [1, 1]} : vector<8x384xf32> to vector<8x128xf32>
    %244 = arith.addf %242, %243 : vector<8x128xf32>
    %245 = arith.negf %244 : vector<8x128xf32>
    %246 = math.exp %245 : vector<8x128xf32>
    %cst_81 = arith.constant 1.000000e+00 : f32
    %247 = vector.broadcast %cst_81 : f32 to vector<8x128xf32>
    %248 = arith.addf %247, %246 : vector<8x128xf32>
    %249 = arith.divf %247, %248 : vector<8x128xf32>
    %250 = vector.extract_strided_slice %228 {offsets = [0, 256], sizes = [8, 128], strides = [1, 1]} : vector<8x384xf32> to vector<8x128xf32>
    %251 = vector.extract_strided_slice %233 {offsets = [0, 256], sizes = [8, 128], strides = [1, 1]} : vector<8x384xf32> to vector<8x128xf32>
    %252 = arith.mulf %241, %251 : vector<8x128xf32>
    %253 = arith.addf %250, %252 : vector<8x128xf32>
    %254 = math.tanh %253 : vector<8x128xf32>
    %cst_82 = arith.constant 1.000000e+00 : f32
    %255 = vector.broadcast %cst_82 : f32 to vector<8x128xf32>
    %256 = arith.subf %255, %249 : vector<8x128xf32>
    %257 = arith.mulf %256, %254 : vector<8x128xf32>
    %258 = arith.mulf %249, %223 : vector<8x128xf32>
    %259 = arith.addf %257, %258 : vector<8x128xf32>
    %c7_i32_83 = arith.constant 7 : i32
    %c7_i32_84 = arith.constant 7 : i32
    %260 = arith.subi %c7_i32_84, %c7_i32_83 : i32
    %c8_i32_85 = arith.constant 8 : i32
    %261 = arith.muli %260, %c8_i32_85 : i32
    %262 = tpu.assume_multiple %261, 8 : i32
    %263 = arith.index_cast %262 : i32 to index
    %c0_86 = arith.constant 0 : index
    %264 = vector.load %arg10[%263, %c0_86] : memref<64x384xf32, #tpu.memory_space<vmem>>, vector<8x384xf32>
    %c0_87 = arith.constant 0 : index
    %c0_88 = arith.constant 0 : index
    %265 = vector.load %arg2[%c0_87, %c0_88] : memref<128x384xf32, #tpu.memory_space<vmem>>, vector<128x384xf32>
    %cst_89 = arith.constant dense<0.000000e+00> : vector<8x384xf32>
    %266 = tpu.matmul %259, %265, %cst_89 {dimension_numbers = #tpu.dot_dimension_numbers<[1], [0], [0], [1], [0, 0, 1, 1], [], []>} : vector<8x128xf32>, vector<128x384xf32>, vector<8x384xf32> -> vector<8x384xf32>
    %c0_90 = arith.constant 0 : index
    %c0_91 = arith.constant 0 : index
    %267 = vector.load %arg4[%c0_90, %c0_91] : memref<1x384xf32, #tpu.memory_space<vmem>>, vector<1x384xf32>
    %268 = vector.broadcast %267 : vector<1x384xf32> to vector<8x384xf32>
    %269 = arith.addf %266, %268 : vector<8x384xf32>
    %270 = vector.extract_strided_slice %264 {offsets = [0, 0], sizes = [8, 128], strides = [1, 1]} : vector<8x384xf32> to vector<8x128xf32>
    %271 = vector.extract_strided_slice %269 {offsets = [0, 0], sizes = [8, 128], strides = [1, 1]} : vector<8x384xf32> to vector<8x128xf32>
    %272 = arith.addf %270, %271 : vector<8x128xf32>
    %273 = arith.negf %272 : vector<8x128xf32>
    %274 = math.exp %273 : vector<8x128xf32>
    %cst_92 = arith.constant 1.000000e+00 : f32
    %275 = vector.broadcast %cst_92 : f32 to vector<8x128xf32>
    %276 = arith.addf %275, %274 : vector<8x128xf32>
    %277 = arith.divf %275, %276 : vector<8x128xf32>
    %278 = vector.extract_strided_slice %264 {offsets = [0, 128], sizes = [8, 128], strides = [1, 1]} : vector<8x384xf32> to vector<8x128xf32>
    %279 = vector.extract_strided_slice %269 {offsets = [0, 128], sizes = [8, 128], strides = [1, 1]} : vector<8x384xf32> to vector<8x128xf32>
    %280 = arith.addf %278, %279 : vector<8x128xf32>
    %281 = arith.negf %280 : vector<8x128xf32>
    %282 = math.exp %281 : vector<8x128xf32>
    %cst_93 = arith.constant 1.000000e+00 : f32
    %283 = vector.broadcast %cst_93 : f32 to vector<8x128xf32>
    %284 = arith.addf %283, %282 : vector<8x128xf32>
    %285 = arith.divf %283, %284 : vector<8x128xf32>
    %286 = vector.extract_strided_slice %264 {offsets = [0, 256], sizes = [8, 128], strides = [1, 1]} : vector<8x384xf32> to vector<8x128xf32>
    %287 = vector.extract_strided_slice %269 {offsets = [0, 256], sizes = [8, 128], strides = [1, 1]} : vector<8x384xf32> to vector<8x128xf32>
    %288 = arith.mulf %277, %287 : vector<8x128xf32>
    %289 = arith.addf %286, %288 : vector<8x128xf32>
    %290 = math.tanh %289 : vector<8x128xf32>
    %cst_94 = arith.constant 1.000000e+00 : f32
    %291 = vector.broadcast %cst_94 : f32 to vector<8x128xf32>
    %292 = arith.subf %291, %285 : vector<8x128xf32>
    %293 = arith.mulf %292, %290 : vector<8x128xf32>
    %294 = arith.mulf %285, %259 : vector<8x128xf32>
    %295 = arith.addf %293, %294 : vector<8x128xf32>
    %c8_i32_95 = arith.constant 8 : i32
    %c0_96 = arith.constant 0 : index
    %c0_97 = arith.constant 0 : index
    %296 = vector.load %arg5[%c0_96, %c0_97] : memref<128x128xf32, #tpu.memory_space<vmem>>, vector<128x128xf32>
    %cst_98 = arith.constant dense<0.000000e+00> : vector<8x128xf32>
    %297 = tpu.matmul %295, %296, %cst_98 {dimension_numbers = #tpu.dot_dimension_numbers<[1], [0], [0], [1], [0, 0, 1, 1], [], []>} : vector<8x128xf32>, vector<128x128xf32>, vector<8x128xf32> -> vector<8x128xf32>
    %c0_99 = arith.constant 0 : index
    %c0_100 = arith.constant 0 : index
    %298 = vector.load %arg6[%c0_99, %c0_100] : memref<1x128xf32, #tpu.memory_space<vmem>>, vector<1x128xf32>
    %299 = vector.broadcast %298 : vector<1x128xf32> to vector<8x128xf32>
    %300 = arith.addf %297, %299 : vector<8x128xf32>
    %301 = math.tanh %300 : vector<8x128xf32>
    %c0_101 = arith.constant 0 : index
    %c0_102 = arith.constant 0 : index
    %302 = vector.load %arg7[%c0_101, %c0_102] : memref<128x128xf32, #tpu.memory_space<vmem>>, vector<128x128xf32>
    %cst_103 = arith.constant dense<0.000000e+00> : vector<8x128xf32>
    %303 = tpu.matmul %301, %302, %cst_103 {dimension_numbers = #tpu.dot_dimension_numbers<[1], [0], [0], [1], [0, 0, 1, 1], [], []>} : vector<8x128xf32>, vector<128x128xf32>, vector<8x128xf32> -> vector<8x128xf32>
    %c0_104 = arith.constant 0 : index
    %c0_105 = arith.constant 0 : index
    %304 = vector.load %arg8[%c0_104, %c0_105] : memref<1x128xf32, #tpu.memory_space<vmem>>, vector<1x128xf32>
    %305 = vector.broadcast %304 : vector<1x128xf32> to vector<8x128xf32>
    %306 = arith.addf %303, %305 : vector<8x128xf32>
    %c0_106 = arith.constant 0 : index
    %c0_107 = arith.constant 0 : index
    %307 = vector.load %arg9[%c0_106, %c0_107] : memref<8x128xf32, #tpu.memory_space<vmem>>, vector<8x128xf32>
    tpu.vector_store %arg9[%c0_106, %c0_107], %306 {strides = array<i32>} : memref<8x128xf32, #tpu.memory_space<vmem>>, vector<8x128xf32>,
    return
  }
}

</mosaic_0001>

<llo_original>
// kernel: tpu_custom_call.1
$region0: #{tpu_custom_call.1}
  #allocation0 [shape = 'u32[]', space=smem, size = 0x4, offset = 0x4, fixed_abs, tag = 'smem constant byte address 0x4 - core index']
  #allocation1 [shape = 'u32[144,128]{1,0:T(1,128)}', space=vmem, size = 0x12000, scoped, tag = 'internal scratch']
  #allocation2 [shape = 'f32[64,384]{1,0:T(8,128)}', space=vmem, size = 0x18000, scoped, tag = 'scratch operand']
  %s0 = inlined_call_operand.vmem [shape: f32[64,17], index: 0, kind: input, shape index: {}]
  %s1 = inlined_call_operand.vmem [shape: f32[17,384], index: 1, kind: input, shape index: {}]
  %s2 = inlined_call_operand.hbm [shape: f32[128,384], index: 2, kind: input, shape index: {}]
  %s3 = inlined_call_operand.vmem [shape: f32[1,384], index: 3, kind: input, shape index: {}]
  %s4 = inlined_call_operand.vmem [shape: f32[1,384], index: 4, kind: input, shape index: {}]
  %s5 = inlined_call_operand.hbm [shape: f32[128,128], index: 5, kind: input, shape index: {}]
  %s6 = inlined_call_operand.vmem [shape: f32[1,128], index: 6, kind: input, shape index: {}]
  %s7 = inlined_call_operand.hbm [shape: f32[128,128], index: 7, kind: input, shape index: {}]
  %s8 = inlined_call_operand.vmem [shape: f32[1,128], index: 8, kind: input, shape index: {}]
  %s9 = inlined_call_operand.hbm [shape: f32[8,128], index: 9, kind: output, shape index: {}]
  %s10 = sld [smem:[#allocation0]]
  $region58: #{tpu_custom_call.1} parent=0
    _
  %s12 = ssub.s32 1, %s10
  %s13 = scalar_select 0, %s12, %s10
  $region1: #{tpu_custom_call.1} parent=0
    #allocation3 [shape = 'u8[196608]{0}', space=vmem, size = 0x30000, scoped, tag = 'input window, operand 2, single buffered']
    #allocation4 [shape = 's32[1]{0}', space=sflag, size = 0x4, scoped, tag = 'scoped memory for tpu_custom_call.1']
    #allocation5 [shape = 's32[1]{0}', space=sflag, size = 0x4, scoped, tag = 'scoped memory for tpu_custom_call.1']
    #allocation6 [shape = 'u8[65536]{0}', space=vmem, size = 0x10000, scoped, tag = 'input window, operand 5, single buffered']
    #allocation7 [shape = 's32[1]{0}', space=sflag, size = 0x4, scoped, tag = 'scoped memory for tpu_custom_call.1']
    #allocation8 [shape = 'u8[65536]{0}', space=vmem, size = 0x10000, scoped, tag = 'input window, operand 7, single buffered']
    #allocation9 [shape = 'u8[4096]{0}', space=vmem, size = 0x1000, scoped, tag = 'output window, operand 0, single buffered']
    %14 = vsyncpa [#allocation4], 0
    %15 = vsyncpa [#allocation7], 0
    %16 = vsyncpa [#allocation5], 0
    // Predicated region
    $region2: #{tpu_custom_call.1} parent=1 // pred_check
      _
    $region3: #{tpu_custom_call.1} parent=1 // pred_check_branch
      %18 = sbr.rel (0) target = $region5
    $region4: #{tpu_custom_call.1} parent=1 // pred_region
      _
    $region5: #{tpu_custom_call.1} parent=1 // pred_fallthru
      _
    // Predicated region
    $region6: #{tpu_custom_call.1} parent=1 // pred_check
      _
    $region7: #{tpu_custom_call.1} parent=1 // pred_check_branch
      %20 = sbr.rel (0) target = $region9
    $region8: #{tpu_custom_call.1} parent=1 // pred_region
      _
    $region9: #{tpu_custom_call.1} parent=1 // pred_fallthru
      _
    // Predicated region
    $region10: #{tpu_custom_call.1} parent=1 // pred_check
      _
    $region11: #{tpu_custom_call.1} parent=1 // pred_check_branch
      %22 = sbr.rel (0) target = $region13
    $region12: #{tpu_custom_call.1} parent=1 // pred_region
      %s24 = ssub.s32 6144, 6144
      %25 = vsyncadd [#allocation4], %s24
      %s26 = sshll.u32 [#allocation3], 4
      %s27 = int_to_ptr.vmem [resolvable:$true] %s26
      %32 = dma.hbm_to_vmem [thread:$0]  %s2, 6144, %s27, [#allocation4], 384, 384, 24
    $region13: #{tpu_custom_call.1} parent=1 // pred_fallthru
      _
    // Predicated region
    $region14: #{tpu_custom_call.1} parent=1 // pred_check
      _
    $region15: #{tpu_custom_call.1} parent=1 // pred_check_branch
      %34 = sbr.rel (0) target = $region17
    $region16: #{tpu_custom_call.1} parent=1 // pred_region
      _
    $region17: #{tpu_custom_call.1} parent=1 // pred_fallthru
      _
    // Predicated region
    $region18: #{tpu_custom_call.1} parent=1 // pred_check
      _
    $region19: #{tpu_custom_call.1} parent=1 // pred_check_branch
      %36 = sbr.rel (0) target = $region21
    $region20: #{tpu_custom_call.1} parent=1 // pred_region
      _
    $region21: #{tpu_custom_call.1} parent=1 // pred_fallthru
      _
    // Predicated region
    $region22: #{tpu_custom_call.1} parent=1 // pred_check
      _
    $region23: #{tpu_custom_call.1} parent=1 // pred_check_branch
      %38 = sbr.rel (0) target = $region25
    $region24: #{tpu_custom_call.1} parent=1 // pred_region
      %s40 = ssub.s32 2048, 2048
      %41 = vsyncadd [#allocation7], %s40
      %s42 = sshll.u32 [#allocation6], 4
      %s43 = int_to_ptr.vmem [resolvable:$true] %s42
      %48 = dma.hbm_to_vmem [thread:$0]  %s5, 2048, %s43, [#allocation7], 128, 128, 8
    $region25: #{tpu_custom_call.1} parent=1 // pred_fallthru
      _
    // Predicated region
    $region26: #{tpu_custom_call.1} parent=1 // pred_check
      _
    $region27: #{tpu_custom_call.1} parent=1 // pred_check_branch
      %50 = sbr.rel (0) target = $region29
    $region28: #{tpu_custom_call.1} parent=1 // pred_region
      _
    $region29: #{tpu_custom_call.1} parent=1 // pred_fallthru
      _
    // Predicated region
    $region30: #{tpu_custom_call.1} parent=1 // pred_check
      _
    $region31: #{tpu_custom_call.1} parent=1 // pred_check_branch
      %52 = sbr.rel (0) target = $region33
    $region32: #{tpu_custom_call.1} parent=1 // pred_region
      %s54 = ssub.s32 2048, 2048
      %55 = vsyncadd [#allocation7], %s54
      %s56 = sshll.u32 [#allocation8], 4
      %s57 = int_to_ptr.vmem [resolvable:$true] %s56
      %62 = dma.hbm_to_vmem [thread:$0]  %s7, 2048, %s57, [#allocation7], 128, 128, 8
    $region33: #{tpu_custom_call.1} parent=1 // pred_fallthru
      _
    // Predicated region
    $region34: #{tpu_custom_call.1} parent=1 // pred_check
      _
    $region35: #{tpu_custom_call.1} parent=1 // pred_check_branch
      %64 = sbr.rel (0) target = $region37
    $region36: #{tpu_custom_call.1} parent=1 // pred_region
      _
    $region37: #{tpu_custom_call.1} parent=1 // pred_fallthru
      _
    // Predicated region
    $region38: #{tpu_custom_call.1} parent=1 // pred_check
      _
    $region39: #{tpu_custom_call.1} parent=1 // pred_check_branch
      %66 = sbr.rel (0) target = $region41
    $region40: #{tpu_custom_call.1} parent=1 // pred_region
      %67 = dma.done [#allocation4], 6144
    $region41: #{tpu_custom_call.1} parent=1 // pred_fallthru
      _
    // Predicated region
    $region42: #{tpu_custom_call.1} parent=1 // pred_check
      _
    $region43: #{tpu_custom_call.1} parent=1 // pred_check_branch
      %69 = sbr.rel (0) target = $region45
    $region44: #{tpu_custom_call.1} parent=1 // pred_region
      %70 = dma.done [#allocation7], 2048
    $region45: #{tpu_custom_call.1} parent=1 // pred_fallthru
      _
    // Predicated region
    $region46: #{tpu_custom_call.1} parent=1 // pred_check
      _
    $region47: #{tpu_custom_call.1} parent=1 // pred_check_branch
      %72 = sbr.rel (0) target = $region49
    $region48: #{tpu_custom_call.1} parent=1 // pred_region
      %73 = dma.done [#allocation7], 2048
    $region49: #{tpu_custom_call.1} parent=1 // pred_fallthru
      _
    %v74 = vld [vmem:[%s0] sm:$0xff]
    %v75 = vld [vmem:[%s0 + $0x8] sm:$0xff]
    %v76 = vld [vmem:[%s0 + $0x10] sm:$0xff]
    %v77 = vld [vmem:[%s0 + $0x18] sm:$0xff]
    %v78 = vld [vmem:[%s0 + $0x20] sm:$0xff]
    %v79 = vld [vmem:[%s0 + $0x28] sm:$0xff]
    %v80 = vld [vmem:[%s0 + $0x30] sm:$0xff]
    %v81 = vld [vmem:[%s0 + $0x38] sm:$0xff]
    %v82 = vld [vmem:[%s1] sm:$0xff]
    %v83 = vld [vmem:[%s1 + $0x8] sm:$0xff]
    %v84 = vld [vmem:[%s1 + $0x10] sm:$0xff]
    %v85 = vld [vmem:[%s1 + $0x18] sm:$0xff]
    %v86 = vld [vmem:[%s1 + $0x20] sm:$0xff]
    %v87 = vld [vmem:[%s1 + $0x28] sm:$0xff]
    %v88 = vld [vmem:[%s1 + $0x30] sm:$0x1]
    %v89 = vld [vmem:[%s1 + $0x38] sm:$0x1]
    %v90 = vld [vmem:[%s1 + $0x40] sm:$0x1]
    %v91 = vld [vmem:[%s3] sm:$0x7]
    %v93 = vlaneseq
    %v94 = vshrl.u32 %v93, 7
    %v95 = vsub.s32 0, %v94
    %v96 = vrot.slane %v91, %v95
    %v97 = vlaneseq
    %v98 = vshrl.u32 %v97, 7
    %v99 = vsub.s32 1, %v98
    %v100 = vrot.slane %v91, %v99
    %v101 = vlaneseq
    %v102 = vshrl.u32 %v101, 7
    %v103 = vsub.s32 2, %v102
    %v104 = vrot.slane %v91, %v103
    %vm108 = vcmask 138240
    %v110 = vsel %vm108, %v74, 0
    %v113 = vsel %vm108, %v75, 0
    %v116 = vsel %vm108, %v76, 0
    %v119 = vsel %vm108, %v77, 0
    %v122 = vsel %vm108, %v78, 0
    %v125 = vsel %vm108, %v79, 0
    %v128 = vsel %vm108, %v80, 0
    %v131 = vsel %vm108, %v81, 0
    %vm133 = vcmask 1040384
    %v135 = vsel %vm133, %v88, 0
    %v138 = vsel %vm133, %v89, 0
    %v141 = vsel %vm133, %v90, 0
    %143 = vmatprep.subr.mxu0 %v83
    %144 = vmatpush1.msra.mxu0 %v82
    %145 = vmatprep.subr.mxu0 %v86
    %146 = vmatpush1.msra.mxu0 %v85
    %147 = vmatprep.subr.mxu0 %v138
    %148 = vmatpush1.msra.mxu0 %v135
    %149 = vmatprep.subr.mxu0 0.0
    %150 = vmatpush1.msra.mxu0 0.0
    %151 = vmatprep.subr.mxu0 0.0
    %152 = vmatpush1.msra.mxu0 0.0
    %153 = vmatprep.subr.mxu0 0.0
    %154 = vmatpush1.msra.mxu0 0.0
    %155 = vmatprep.subr.mxu0 0.0
    %156 = vmatpush1.msra.mxu0 0.0
    %157 = vmatprep.subr.mxu0 0.0
    %158 = vmatpush1.msra.mxu0 0.0
    %159 = vmatprep.subr.mxu0 0.0
    %160 = vmatpush1.msra.mxu0 0.0
    %161 = vmatprep.subr.mxu0 0.0
    %162 = vmatpush1.msra.mxu0 0.0
    %163 = vmatprep.subr.mxu0 0.0
    %164 = vmatpush1.msra.mxu0 0.0
    %165 = vmatprep.subr.mxu0 0.0
    %166 = vmatpush1.msra.mxu0 0.0
    %167 = vmatprep.subr.mxu0 0.0
    %168 = vmatpush1.msra.mxu0 0.0
    %169 = vmatprep.subr.mxu0 0.0
    %170 = vmatpush1.msra.mxu0 0.0
    %171 = vmatprep.subr.mxu0 0.0
    %172 = vmatpush1.msra.mxu0 0.0
    %173 = vmatprep.subr.mxu0 0.0
    %174 = vmatpush1.msra.mxu0 0.0
    %175 = vmatprep.subr.mxu0 0.0
    %176 = vmatpush1.msra.mxu0 0.0
    %177 = vmatprep.subr.mxu0 0.0
    %178 = vmatpush1.msra.mxu0 0.0
    %179 = vmatprep.subr.mxu0 0.0
    %180 = vmatpush1.msra.mxu0 0.0
    %181 = vmatprep.subr.mxu0 0.0
    %182 = vmatpush1.msra.mxu0 0.0
    %183 = vmatprep.subr.mxu0 0.0
    %184 = vmatpush1.msra.mxu0 0.0
    %185 = vmatprep.subr.mxu0 0.0
    %186 = vmatpush1.msra.mxu0 0.0
    %187 = vmatprep.subr.mxu0 0.0
    %188 = vmatpush1.msra.mxu0 0.0
    %189 = vmatprep.subr.mxu0 0.0
    %190 = vmatpush1.msra.mxu0 0.0
    %191 = vmatprep.subr.mxu0 0.0
    %192 = vmatpush1.msra.mxu0 0.0
    %193 = vmatprep.subr.mxu0 0.0
    %194 = vmatpush1.msra.mxu0 0.0
    %195 = vmatprep.subr.mxu0 0.0
    %196 = vmatpush1.msra.mxu0 0.0
    %197 = vmatprep.subr.mxu0 0.0
    %198 = vmatpush1.msra.mxu0 0.0
    %199 = vmatprep.subr.mxu0 0.0
    %200 = vmatpush1.msra.mxu0 0.0
    %201 = vmatprep.subr.mxu0 0.0
    %202 = vmatpush1.msra.mxu0 0.0
    %203 = vmatprep.subr.mxu0 0.0
    %204 = vmatpush1.msra.mxu0 0.0
    %205 = vmatprep.subr.mxu0 0.0
    %206 = vmatpush1.msra.mxu0 0.0
    %207 = vmatprep.mubr.f32.mxu0 0.0
    %208 = vmatmul.mubr.f32.gmra.mrb[0].mxu0 %v110
    %v209 = vpop.f32.mrb[0].mxu0
    %v210 = vadd.f32 %v96, %v209
    %v211 = vpop.f32.mrb[0].mxu0
    %v212 = vadd.f32 %v100, %v211
    %213 = vmatprep.mubr.f32.mxu0 0.0
    %214 = vmatmul.mubr.f32.gmra.mrb[0].mxu0 %v113
    %v215 = vpop.f32.mrb[0].mxu0
    %v216 = vadd.f32 %v96, %v215
    %v217 = vpop.f32.mrb[0].mxu0
    %v218 = vadd.f32 %v100, %v217
    %219 = vmatprep.mubr.f32.mxu0 0.0
    %220 = vmatmul.mubr.f32.gmra.mrb[0].mxu0 %v116
    %v221 = vpop.f32.mrb[0].mxu0
    %v222 = vadd.f32 %v96, %v221
    %v223 = vpop.f32.mrb[0].mxu0
    %v224 = vadd.f32 %v100, %v223
    %225 = vmatprep.mubr.f32.mxu0 0.0
    %226 = vmatmul.mubr.f32.gmra.mrb[0].mxu0 %v119
    %v227 = vpop.f32.mrb[0].mxu0
    %v228 = vadd.f32 %v96, %v227
    %v229 = vpop.f32.mrb[0].mxu0
    %v230 = vadd.f32 %v100, %v229
    %231 = vmatprep.mubr.f32.mxu0 0.0
    %232 = vmatmul.mubr.f32.gmra.mrb[0].mxu0 %v122
    %v233 = vpop.f32.mrb[0].mxu0
    %v234 = vadd.f32 %v96, %v233
    %v235 = vpop.f32.mrb[0].mxu0
    %v236 = vadd.f32 %v100, %v235
    %237 = vmatprep.mubr.f32.mxu0 0.0
    %238 = vmatmul.mubr.f32.gmra.mrb[0].mxu0 %v125
    %v239 = vpop.f32.mrb[0].mxu0
    %v240 = vadd.f32 %v96, %v239
    %v241 = vpop.f32.mrb[0].mxu0
    %v242 = vadd.f32 %v100, %v241
    %243 = vmatprep.mubr.f32.mxu0 0.0
    %244 = vmatmul.mubr.f32.gmra.mrb[0].mxu0 %v128
    %v245 = vpop.f32.mrb[0].mxu0
    %v246 = vadd.f32 %v96, %v245
    %v247 = vpop.f32.mrb[0].mxu0
    %v248 = vadd.f32 %v100, %v247
    %249 = vmatprep.mubr.f32.mxu0 0.0
    %250 = vmatmul.mubr.f32.gmra.mrb[0].mxu0 %v131
    %v251 = vpop.f32.mrb[0].mxu0
    %v252 = vadd.f32 %v96, %v251
    %v253 = vpop.f32.mrb[0].mxu0
    %v254 = vadd.f32 %v100, %v253
    %255 = vdwg.mxu0
    %256 = vmatprep.subr.mxu0 0.0
    %257 = vmatpush1.msra.mxu0 %v84
    %258 = vmatprep.subr.mxu0 0.0
    %259 = vmatpush1.msra.mxu0 %v87
    %260 = vmatprep.subr.mxu0 0.0
    %261 = vmatpush1.msra.mxu0 %v141
    %262 = vmatprep.subr.mxu0 0.0
    %263 = vmatpush1.msra.mxu0 0.0
    %264 = vmatprep.subr.mxu0 0.0
    %265 = vmatpush1.msra.mxu0 0.0
    %266 = vmatprep.subr.mxu0 0.0
    %267 = vmatpush1.msra.mxu0 0.0
    %268 = vmatprep.subr.mxu0 0.0
    %269 = vmatpush1.msra.mxu0 0.0
    %270 = vmatprep.subr.mxu0 0.0
    %271 = vmatpush1.msra.mxu0 0.0
    %272 = vmatprep.subr.mxu0 0.0
    %273 = vmatpush1.msra.mxu0 0.0
    %274 = vmatprep.subr.mxu0 0.0
    %275 = vmatpush1.msra.mxu0 0.0
    %276 = vmatprep.subr.mxu0 0.0
    %277 = vmatpush1.msra.mxu0 0.0
    %278 = vmatprep.subr.mxu0 0.0
    %279 = vmatpush1.msra.mxu0 0.0
    %280 = vmatprep.subr.mxu0 0.0
    %281 = vmatpush1.msra.mxu0 0.0
    %282 = vmatprep.subr.mxu0 0.0
    %283 = vmatpush1.msra.mxu0 0.0
    %284 = vmatprep.subr.mxu0 0.0
    %285 = vmatpush1.msra.mxu0 0.0
    %286 = vmatprep.subr.mxu0 0.0
    %287 = vmatpush1.msra.mxu0 0.0
    %288 = vmatprep.subr.mxu0 0.0
    %289 = vmatpush1.msra.mxu0 0.0
    %290 = vmatprep.subr.mxu0 0.0
    %291 = vmatpush1.msra.mxu0 0.0
    %292 = vmatprep.subr.mxu0 0.0
    %293 = vmatpush1.msra.mxu0 0.0
    %294 = vmatprep.subr.mxu0 0.0
    %295 = vmatpush1.msra.mxu0 0.0
    %296 = vmatprep.subr.mxu0 0.0
    %297 = vmatpush1.msra.mxu0 0.0
    %298 = vmatprep.subr.mxu0 0.0
    %299 = vmatpush1.msra.mxu0 0.0
    %300 = vmatprep.subr.mxu0 0.0
    %301 = vmatpush1.msra.mxu0 0.0
    %302 = vmatprep.subr.mxu0 0.0
    %303 = vmatpush1.msra.mxu0 0.0
    %304 = vmatprep.subr.mxu0 0.0
    %305 = vmatpush1.msra.mxu0 0.0
    %306 = vmatprep.subr.mxu0 0.0
    %307 = vmatpush1.msra.mxu0 0.0
    %308 = vmatprep.subr.mxu0 0.0
    %309 = vmatpush1.msra.mxu0 0.0
    %310 = vmatprep.subr.mxu0 0.0
    %311 = vmatpush1.msra.mxu0 0.0
    %312 = vmatprep.subr.mxu0 0.0
    %313 = vmatpush1.msra.mxu0 0.0
    %314 = vmatprep.subr.mxu0 0.0
    %315 = vmatpush1.msra.mxu0 0.0
    %316 = vmatprep.subr.mxu0 0.0
    %317 = vmatpush1.msra.mxu0 0.0
    %318 = vmatprep.subr.mxu0 0.0
    %319 = vmatpush1.msra.mxu0 0.0
    %320 = vmatprep.mubr.f32.mxu0 0.0
    %321 = vmatmul.mubr.f32.gmra.mrb[0].mxu0 %v110
    %v322 = vpop.f32.mrb[0].mxu0
    %v323 = vadd.f32 %v104, %v322
    %v324 = vpop.f32.mrb[0].mxu0
    %325 = vmatprep.mubr.f32.mxu0 0.0
    %326 = vmatmul.mubr.f32.gmra.mrb[0].mxu0 %v113
    %v327 = vpop.f32.mrb[0].mxu0
    %v328 = vadd.f32 %v104, %v327
    %v329 = vpop.f32.mrb[0].mxu0
    %330 = vmatprep.mubr.f32.mxu0 0.0
    %331 = vmatmul.mubr.f32.gmra.mrb[0].mxu0 %v116
    %v332 = vpop.f32.mrb[0].mxu0
    %v333 = vadd.f32 %v104, %v332
    %v334 = vpop.f32.mrb[0].mxu0
    %335 = vmatprep.mubr.f32.mxu0 0.0
    %336 = vmatmul.mubr.f32.gmra.mrb[0].mxu0 %v119
    %v337 = vpop.f32.mrb[0].mxu0
    %v338 = vadd.f32 %v104, %v337
    %v339 = vpop.f32.mrb[0].mxu0
    %340 = vmatprep.mubr.f32.mxu0 0.0
    %341 = vmatmul.mubr.f32.gmra.mrb[0].mxu0 %v122
    %v342 = vpop.f32.mrb[0].mxu0
    %v343 = vadd.f32 %v104, %v342
    %v344 = vpop.f32.mrb[0].mxu0
    %345 = vmatprep.mubr.f32.mxu0 0.0
    %346 = vmatmul.mubr.f32.gmra.mrb[0].mxu0 %v125
    %v347 = vpop.f32.mrb[0].mxu0
    %v348 = vadd.f32 %v104, %v347
    %v349 = vpop.f32.mrb[0].mxu0
    %350 = vmatprep.mubr.f32.mxu0 0.0
    %351 = vmatmul.mubr.f32.gmra.mrb[0].mxu0 %v128
    %v352 = vpop.f32.mrb[0].mxu0
    %v353 = vadd.f32 %v104, %v352
    %v354 = vpop.f32.mrb[0].mxu0
    %355 = vmatprep.mubr.f32.mxu0 0.0
    %356 = vmatmul.mubr.f32.gmra.mrb[0].mxu0 %v131
    %v357 = vpop.f32.mrb[0].mxu0
    %v358 = vadd.f32 %v104, %v357
    %v359 = vpop.f32.mrb[0].mxu0
    %360 = vdwg.mxu0
    %361 = vst [vmem:[#allocation2] sm:$0xff] %v210
    %362 = vst [vmem:[#allocation2 + $0x8] sm:$0xff] %v212
    %363 = vst [vmem:[#allocation2 + $0x10] sm:$0xff] %v323
    %364 = vst [vmem:[#allocation2 + $0x18] sm:$0xff] %v216
    %365 = vst [vmem:[#allocation2 + $0x20] sm:$0xff] %v218
    %366 = vst [vmem:[#allocation2 + $0x28] sm:$0xff] %v328
    %367 = vst [vmem:[#allocation2 + $0x30] sm:$0xff] %v222
    %368 = vst [vmem:[#allocation2 + $0x38] sm:$0xff] %v224
    %369 = vst [vmem:[#allocation2 + $0x40] sm:$0xff] %v333
    %370 = vst [vmem:[#allocation2 + $0x48] sm:$0xff] %v228
    %371 = vst [vmem:[#allocation2 + $0x50] sm:$0xff] %v230
    %372 = vst [vmem:[#allocation2 + $0x58] sm:$0xff] %v338
    %373 = vst [vmem:[#allocation2 + $0x60] sm:$0xff] %v234
    %374 = vst [vmem:[#allocation2 + $0x68] sm:$0xff] %v236
    %375 = vst [vmem:[#allocation2 + $0x70] sm:$0xff] %v343
    %376 = vst [vmem:[#allocation2 + $0x78] sm:$0xff] %v240
    %377 = vst [vmem:[#allocation2 + $0x80] sm:$0xff] %v242
    %378 = vst [vmem:[#allocation2 + $0x88] sm:$0xff] %v348
    %379 = vst [vmem:[#allocation2 + $0x90] sm:$0xff] %v246
    %380 = vst [vmem:[#allocation2 + $0x98] sm:$0xff] %v248
    %381 = vst [vmem:[#allocation2 + $0xa0] sm:$0xff] %v353
    %382 = vst [vmem:[#allocation2 + $0xa8] sm:$0xff] %v252
    %383 = vst [vmem:[#allocation2 + $0xb0] sm:$0xff] %v254
    %384 = vst [vmem:[#allocation2 + $0xb8] sm:$0xff] %v358
    %s385 = smul.u32 7, 3
    %s386 = smul.addr %s385, 8
    %s387 = scalar_lea.vmem [#allocation2], %s386
    %v388 = vld [vmem:[%s387] sm:$0xff]
    %v389 = vld [vmem:[%s387 + $0x8] sm:$0xff]
    %v390 = vld [vmem:[%s387 + $0x10] sm:$0xff]
    %v391 = vld [vmem:[#allocation3] sm:$0xff]
    %v392 = vld [vmem:[#allocation3 + $0x8] sm:$0xff]
    %v393 = vld [vmem:[#allocation3 + $0x10] sm:$0xff]
    %v394 = vld [vmem:[#allocation3 + $0x18] sm:$0xff]
    %v395 = vld [vmem:[#allocation3 + $0x20] sm:$0xff]
    %v396 = vld [vmem:[#allocation3 + $0x28] sm:$0xff]
    %v397 = vld [vmem:[#allocation3 + $0x30] sm:$0xff]
    %v398 = vld [vmem:[#allocation3 + $0x38] sm:$0xff]
    %v399 = vld [vmem:[#allocation3 + $0x40] sm:$0xff]
    %v400 = vld [vmem:[#allocation3 + $0x48] sm:$0xff]
    %v401 = vld [vmem:[#allocation3 + $0x50] sm:$0xff]
    %v402 = vld [vmem:[#allocation3 + $0x58] sm:$0xff]
    %v403 = vld [vmem:[#allocation3 + $0x60] sm:$0xff]
    %v404 = vld [vmem:[#allocation3 + $0x68] sm:$0xff]
    %v405 = vld [vmem:[#allocation3 + $0x70] sm:$0xff]
    %v406 = vld [vmem:[#allocation3 + $0x78] sm:$0xff]
    %v407 = vld [vmem:[#allocation3 + $0x80] sm:$0xff]
    %v408 = vld [vmem:[#allocation3 + $0x88] sm:$0xff]
    %v409 = vld [vmem:[#allocation3 + $0x90] sm:$0xff]
    %v410 = vld [vmem:[#allocation3 + $0x98] sm:$0xff]
    %v411 = vld [vmem:[#allocation3 + $0xa0] sm:$0xff]
    %v412 = vld [vmem:[#allocation3 + $0xa8] sm:$0xff]
    %v413 = vld [vmem:[#allocation3 + $0xb0] sm:$0xff]
    %v414 = vld [vmem:[#allocation3 + $0xb8] sm:$0xff]
    %v415 = vld [vmem:[#allocation3 + $0xc0] sm:$0xff]
    %v416 = vld [vmem:[#allocation3 + $0xc8] sm:$0xff]
    %v417 = vld [vmem:[#allocation3 + $0xd0] sm:$0xff]
    %v418 = vld [vmem:[#allocation3 + $0xd8] sm:$0xff]
    %v419 = vld [vmem:[#allocation3 + $0xe0] sm:$0xff]
    %v420 = vld [vmem:[#allocation3 + $0xe8] sm:$0xff]
    %v421 = vld [vmem:[#allocation3 + $0xf0] sm:$0xff]
    %v422 = vld [vmem:[#allocation3 + $0xf8] sm:$0xff]
    %v423 = vld [vmem:[#allocation3 + $0x100] sm:$0xff]
    %v424 = vld [vmem:[#allocation3 + $0x108] sm:$0xff]
    %v425 = vld [vmem:[#allocation3 + $0x110] sm:$0xff]
    %v426 = vld [vmem:[#allocation3 + $0x118] sm:$0xff]
    %v427 = vld [vmem:[#allocation3 + $0x120] sm:$0xff]
    %v428 = vld [vmem:[#allocation3 + $0x128] sm:$0xff]
    %v429 = vld [vmem:[#allocation3 + $0x130] sm:$0xff]
    %v430 = vld [vmem:[#allocation3 + $0x138] sm:$0xff]
    %v431 = vld [vmem:[#allocation3 + $0x140] sm:$0xff]
    %v432 = vld [vmem:[#allocation3 + $0x148] sm:$0xff]
    %v433 = vld [vmem:[#allocation3 + $0x150] sm:$0xff]
    %v434 = vld [vmem:[#allocation3 + $0x158] sm:$0xff]
    %v435 = vld [vmem:[#allocation3 + $0x160] sm:$0xff]
    %v436 = vld [vmem:[#allocation3 + $0x168] sm:$0xff]
    %v437 = vld [vmem:[#allocation3 + $0x170] sm:$0xff]
    %v438 = vld [vmem:[#allocation3 + $0x178] sm:$0xff]
    %v439 = vld [vmem:[%s4] sm:$0x7]
    %v441 = vlaneseq
    %v442 = vshrl.u32 %v441, 7
    %v443 = vsub.s32 0, %v442
    %v444 = vrot.slane %v439, %v443
    %v445 = vlaneseq
    %v446 = vshrl.u32 %v445, 7
    %v447 = vsub.s32 1, %v446
    %v448 = vrot.slane %v439, %v447
    %v449 = vlaneseq
    %v450 = vshrl.u32 %v449, 7
    %v451 = vsub.s32 2, %v450
    %v452 = vrot.slane %v439, %v451
    %456 = vmatprep.subr.mxu0 %v392
    %457 = vmatpush1.msra.mxu0 %v391
    %458 = vmatprep.subr.mxu0 %v395
    %459 = vmatpush1.msra.mxu0 %v394
    %460 = vmatprep.subr.mxu0 %v398
    %461 = vmatpush1.msra.mxu0 %v397
    %462 = vmatprep.subr.mxu0 %v401
    %463 = vmatpush1.msra.mxu0 %v400
    %464 = vmatprep.subr.mxu0 %v404
    %465 = vmatpush1.msra.mxu0 %v403
    %466 = vmatprep.subr.mxu0 %v407
    %467 = vmatpush1.msra.mxu0 %v406
    %468 = vmatprep.subr.mxu0 %v410
    %469 = vmatpush1.msra.mxu0 %v409
    %470 = vmatprep.subr.mxu0 %v413
    %471 = vmatpush1.msra.mxu0 %v412
    %472 = vmatprep.subr.mxu0 %v416
    %473 = vmatpush1.msra.mxu0 %v415
    %474 = vmatprep.subr.mxu0 %v419
    %475 = vmatpush1.msra.mxu0 %v418
    %476 = vmatprep.subr.mxu0 %v422
    %477 = vmatpush1.msra.mxu0 %v421
    %478 = vmatprep.subr.mxu0 %v425
    %479 = vmatpush1.msra.mxu0 %v424
    %480 = vmatprep.subr.mxu0 %v428
    %481 = vmatpush1.msra.mxu0 %v427
    %482 = vmatprep.subr.mxu0 %v431
    %483 = vmatpush1.msra.mxu0 %v430
    %484 = vmatprep.subr.mxu0 %v434
    %485 = vmatpush1.msra.mxu0 %v433
    %486 = vmatprep.subr.mxu0 %v437
    %487 = vmatpush1.msra.mxu0 %v436
    %488 = vmatprep.subr.mxu0 0.0
    %489 = vmatpush1.msra.mxu0 0.0
    %490 = vmatprep.subr.mxu0 0.0
    %491 = vmatpush1.msra.mxu0 0.0
    %492 = vmatprep.subr.mxu0 0.0
    %493 = vmatpush1.msra.mxu0 0.0
    %494 = vmatprep.subr.mxu0 0.0
    %495 = vmatpush1.msra.mxu0 0.0
    %496 = vmatprep.subr.mxu0 0.0
    %497 = vmatpush1.msra.mxu0 0.0
    %498 = vmatprep.subr.mxu0 0.0
    %499 = vmatpush1.msra.mxu0 0.0
    %500 = vmatprep.subr.mxu0 0.0
    %501 = vmatpush1.msra.mxu0 0.0
    %502 = vmatprep.subr.mxu0 0.0
    %503 = vmatpush1.msra.mxu0 0.0
    %504 = vmatprep.subr.mxu0 0.0
    %505 = vmatpush1.msra.mxu0 0.0
    %506 = vmatprep.subr.mxu0 0.0
    %507 = vmatpush1.msra.mxu0 0.0
    %508 = vmatprep.subr.mxu0 0.0
    %509 = vmatpush1.msra.mxu0 0.0
    %510 = vmatprep.subr.mxu0 0.0
    %511 = vmatpush1.msra.mxu0 0.0
    %512 = vmatprep.subr.mxu0 0.0
    %513 = vmatpush1.msra.mxu0 0.0
    %514 = vmatprep.subr.mxu0 0.0
    %515 = vmatpush1.msra.mxu0 0.0
    %516 = vmatprep.subr.mxu0 0.0
    %517 = vmatpush1.msra.mxu0 0.0
    %518 = vmatprep.subr.mxu0 0.0
    %519 = vmatpush1.msra.mxu0 0.0
    %520 = vmatprep.mubr.f32.mxu0 0.0
    %521 = vmatmul.mubr.f32.gmra.mrb[0].mxu0 0.0
    %v522 = vpop.f32.mrb[0].mxu0
    %v523 = vadd.f32 %v444, %v522
    %v524 = vpop.f32.mrb[0].mxu0
    %v525 = vadd.f32 %v448, %v524
    %526 = vdwg.mxu0
    %527 = vmatprep.subr.mxu0 0.0
    %528 = vmatpush1.msra.mxu0 %v393
    %529 = vmatprep.subr.mxu0 0.0
    %530 = vmatpush1.msra.mxu0 %v396
    %531 = vmatprep.subr.mxu0 0.0
    %532 = vmatpush1.msra.mxu0 %v399
    %533 = vmatprep.subr.mxu0 0.0
    %534 = vmatpush1.msra.mxu0 %v402
    %535 = vmatprep.subr.mxu0 0.0
    %536 = vmatpush1.msra.mxu0 %v405
    %537 = vmatprep.subr.mxu0 0.0
    %538 = vmatpush1.msra.mxu0 %v408
    %539 = vmatprep.subr.mxu0 0.0
    %540 = vmatpush1.msra.mxu0 %v411
    %541 = vmatprep.subr.mxu0 0.0
    %542 = vmatpush1.msra.mxu0 %v414
    %543 = vmatprep.subr.mxu0 0.0
    %544 = vmatpush1.msra.mxu0 %v417
    %545 = vmatprep.subr.mxu0 0.0
    %546 = vmatpush1.msra.mxu0 %v420
    %547 = vmatprep.subr.mxu0 0.0
    %548 = vmatpush1.msra.mxu0 %v423
    %549 = vmatprep.subr.mxu0 0.0
    %550 = vmatpush1.msra.mxu0 %v426
    %551 = vmatprep.subr.mxu0 0.0
    %552 = vmatpush1.msra.mxu0 %v429
    %553 = vmatprep.subr.mxu0 0.0
    %554 = vmatpush1.msra.mxu0 %v432
    %555 = vmatprep.subr.mxu0 0.0
    %556 = vmatpush1.msra.mxu0 %v435
    %557 = vmatprep.subr.mxu0 0.0
    %558 = vmatpush1.msra.mxu0 %v438
    %559 = vmatprep.subr.mxu0 0.0
    %560 = vmatpush1.msra.mxu0 0.0
    %561 = vmatprep.subr.mxu0 0.0
    %562 = vmatpush1.msra.mxu0 0.0
    %563 = vmatprep.subr.mxu0 0.0
    %564 = vmatpush1.msra.mxu0 0.0
    %565 = vmatprep.subr.mxu0 0.0
    %566 = vmatpush1.msra.mxu0 0.0
    %567 = vmatprep.subr.mxu0 0.0
    %568 = vmatpush1.msra.mxu0 0.0
    %569 = vmatprep.subr.mxu0 0.0
    %570 = vmatpush1.msra.mxu0 0.0
    %571 = vmatprep.subr.mxu0 0.0
    %572 = vmatpush1.msra.mxu0 0.0
    %573 = vmatprep.subr.mxu0 0.0
    %574 = vmatpush1.msra.mxu0 0.0
    %575 = vmatprep.subr.mxu0 0.0
    %576 = vmatpush1.msra.mxu0 0.0
    %577 = vmatprep.subr.mxu0 0.0
    %578 = vmatpush1.msra.mxu0 0.0
    %579 = vmatprep.subr.mxu0 0.0
    %580 = vmatpush1.msra.mxu0 0.0
    %581 = vmatprep.subr.mxu0 0.0
    %582 = vmatpush1.msra.mxu0 0.0
    %583 = vmatprep.subr.mxu0 0.0
    %584 = vmatpush1.msra.mxu0 0.0
    %585 = vmatprep.subr.mxu0 0.0
    %586 = vmatpush1.msra.mxu0 0.0
    %587 = vmatprep.subr.mxu0 0.0
    %588 = vmatpush1.msra.mxu0 0.0
    %589 = vmatprep.subr.mxu0 0.0
    %590 = vmatpush1.msra.mxu0 0.0
    %591 = vmatprep.mubr.f32.mxu0 0.0
    %592 = vmatmul.mubr.f32.gmra.mrb[0].mxu0 0.0
    %v593 = vpop.f32.mrb[0].mxu0
    %v594 = vadd.f32 %v452, %v593
    %v595 = vpop.f32.mrb[0].mxu0
    %596 = vdwg.mxu0
    %v597 = vadd.f32 %v388, %v523
    %v598 = vxor.u32 %v597, 2147483648
    %v599 = vmul.f32 %v598, 1.442695
    %v600 = vpow.pop %v599
    %v601 = vadd.f32 %v600, 1.0
    %v602 = vrcp.pop %v601
    %v603 = vmul.f32 1.0, %v602
    %v604 = vadd.f32 %v389, %v525
    %v605 = vxor.u32 %v604, 2147483648
    %v606 = vmul.f32 %v605, 1.442695
    %v607 = vpow.pop %v606
    %v608 = vadd.f32 %v607, 1.0
    %v609 = vrcp.pop %v608
    %v610 = vmul.f32 1.0, %v609
    %v611 = vmul.f32 %v603, %v594
    %v612 = vadd.f32 %v390, %v611
    %v613 = vtanh.pop %v612
    %v614 = vsub.f32 1.0, %v610
    %v615 = vmul.f32 %v614, %v613
    %v616 = vmul.f32 %v610, 0.0
    %v617 = vadd.f32 %v615, %v616
    %s618 = smul.u32 6, 3
    %s619 = smul.addr %s618, 8
    %s620 = scalar_lea.vmem [#allocation2], %s619
    %v621 = vld [vmem:[%s620] sm:$0xff]
    %v622 = vld [vmem:[%s620 + $0x8] sm:$0xff]
    %v623 = vld [vmem:[%s620 + $0x10] sm:$0xff]
    %624 = vmatprep.subr.mxu0 %v392
    %625 = vmatpush1.msra.mxu0 %v391
    %626 = vmatprep.subr.mxu0 %v395
    %627 = vmatpush1.msra.mxu0 %v394
    %628 = vmatprep.subr.mxu0 %v398
    %629 = vmatpush1.msra.mxu0 %v397
    %630 = vmatprep.subr.mxu0 %v401
    %631 = vmatpush1.msra.mxu0 %v400
    %632 = vmatprep.subr.mxu0 %v404
    %633 = vmatpush1.msra.mxu0 %v403
    %634 = vmatprep.subr.mxu0 %v407
    %635 = vmatpush1.msra.mxu0 %v406
    %636 = vmatprep.subr.mxu0 %v410
    %637 = vmatpush1.msra.mxu0 %v409
    %638 = vmatprep.subr.mxu0 %v413
    %639 = vmatpush1.msra.mxu0 %v412
    %640 = vmatprep.subr.mxu0 %v416
    %641 = vmatpush1.msra.mxu0 %v415
    %642 = vmatprep.subr.mxu0 %v419
    %643 = vmatpush1.msra.mxu0 %v418
    %644 = vmatprep.subr.mxu0 %v422
    %645 = vmatpush1.msra.mxu0 %v421
    %646 = vmatprep.subr.mxu0 %v425
    %647 = vmatpush1.msra.mxu0 %v424
    %648 = vmatprep.subr.mxu0 %v428
    %649 = vmatpush1.msra.mxu0 %v427
    %650 = vmatprep.subr.mxu0 %v431
    %651 = vmatpush1.msra.mxu0 %v430
    %652 = vmatprep.subr.mxu0 %v434
    %653 = vmatpush1.msra.mxu0 %v433
    %654 = vmatprep.subr.mxu0 %v437
    %655 = vmatpush1.msra.mxu0 %v436
    %656 = vmatprep.subr.mxu0 0.0
    %657 = vmatpush1.msra.mxu0 0.0
    %658 = vmatprep.subr.mxu0 0.0
    %659 = vmatpush1.msra.mxu0 0.0
    %660 = vmatprep.subr.mxu0 0.0
    %661 = vmatpush1.msra.mxu0 0.0
    %662 = vmatprep.subr.mxu0 0.0
    %663 = vmatpush1.msra.mxu0 0.0
    %664 = vmatprep.subr.mxu0 0.0
    %665 = vmatpush1.msra.mxu0 0.0
    %666 = vmatprep.subr.mxu0 0.0
    %667 = vmatpush1.msra.mxu0 0.0
    %668 = vmatprep.subr.mxu0 0.0
    %669 = vmatpush1.msra.mxu0 0.0
    %670 = vmatprep.subr.mxu0 0.0
    %671 = vmatpush1.msra.mxu0 0.0
    %672 = vmatprep.subr.mxu0 0.0
    %673 = vmatpush1.msra.mxu0 0.0
    %674 = vmatprep.subr.mxu0 0.0
    %675 = vmatpush1.msra.mxu0 0.0
    %676 = vmatprep.subr.mxu0 0.0
    %677 = vmatpush1.msra.mxu0 0.0
    %678 = vmatprep.subr.mxu0 0.0
    %679 = vmatpush1.msra.mxu0 0.0
    %680 = vmatprep.subr.mxu0 0.0
    %681 = vmatpush1.msra.mxu0 0.0
    %682 = vmatprep.subr.mxu0 0.0
    %683 = vmatpush1.msra.mxu0 0.0
    %684 = vmatprep.subr.mxu0 0.0
    %685 = vmatpush1.msra.mxu0 0.0
    %686 = vmatprep.subr.mxu0 0.0
    %687 = vmatpush1.msra.mxu0 0.0
    %688 = vmatprep.mubr.f32.mxu0 0.0
    %689 = vmatmul.mubr.f32.gmra.mrb[0].mxu0 %v617
    %v690 = vpop.f32.mrb[0].mxu0
    %v691 = vadd.f32 %v444, %v690
    %v692 = vpop.f32.mrb[0].mxu0
    %v693 = vadd.f32 %v448, %v692
    %694 = vdwg.mxu0
    %695 = vmatprep.subr.mxu0 0.0
    %696 = vmatpush1.msra.mxu0 %v393
    %697 = vmatprep.subr.mxu0 0.0
    %698 = vmatpush1.msra.mxu0 %v396
    %699 = vmatprep.subr.mxu0 0.0
    %700 = vmatpush1.msra.mxu0 %v399
    %701 = vmatprep.subr.mxu0 0.0
    %702 = vmatpush1.msra.mxu0 %v402
    %703 = vmatprep.subr.mxu0 0.0
    %704 = vmatpush1.msra.mxu0 %v405
    %705 = vmatprep.subr.mxu0 0.0
    %706 = vmatpush1.msra.mxu0 %v408
    %707 = vmatprep.subr.mxu0 0.0
    %708 = vmatpush1.msra.mxu0 %v411
    %709 = vmatprep.subr.mxu0 0.0
    %710 = vmatpush1.msra.mxu0 %v414
    %711 = vmatprep.subr.mxu0 0.0
    %712 = vmatpush1.msra.mxu0 %v417
    %713 = vmatprep.subr.mxu0 0.0
    %714 = vmatpush1.msra.mxu0 %v420
    %715 = vmatprep.subr.mxu0 0.0
    %716 = vmatpush1.msra.mxu0 %v423
    %717 = vmatprep.subr.mxu0 0.0
    %718 = vmatpush1.msra.mxu0 %v426
    %719 = vmatprep.subr.mxu0 0.0
    %720 = vmatpush1.msra.mxu0 %v429
    %721 = vmatprep.subr.mxu0 0.0
    %722 = vmatpush1.msra.mxu0 %v432
    %723 = vmatprep.subr.mxu0 0.0
    %724 = vmatpush1.msra.mxu0 %v435
    %725 = vmatprep.subr.mxu0 0.0
    %726 = vmatpush1.msra.mxu0 %v438
    %727 = vmatprep.subr.mxu0 0.0
    %728 = vmatpush1.msra.mxu0 0.0
    %729 = vmatprep.subr.mxu0 0.0
    %730 = vmatpush1.msra.mxu0 0.0
    %731 = vmatprep.subr.mxu0 0.0
    %732 = vmatpush1.msra.mxu0 0.0
    %733 = vmatprep.subr.mxu0 0.0
    %734 = vmatpush1.msra.mxu0 0.0
    %735 = vmatprep.subr.mxu0 0.0
    %736 = vmatpush1.msra.mxu0 0.0
    %737 = vmatprep.subr.mxu0 0.0
    %738 = vmatpush1.msra.mxu0 0.0
    %739 = vmatprep.subr.mxu0 0.0
    %740 = vmatpush1.msra.mxu0 0.0
    %741 = vmatprep.subr.mxu0 0.0
    %742 = vmatpush1.msra.mxu0 0.0
    %743 = vmatprep.subr.mxu0 0.0
    %744 = vmatpush1.msra.mxu0 0.0
    %745 = vmatprep.subr.mxu0 0.0
    %746 = vmatpush1.msra.mxu0 0.0
    %747 = vmatprep.subr.mxu0 0.0
    %748 = vmatpush1.msra.mxu0 0.0
    %749 = vmatprep.subr.mxu0 0.0
    %750 = vmatpush1.msra.mxu0 0.0
    %751 = vmatprep.subr.mxu0 0.0
    %752 = vmatpush1.msra.mxu0 0.0
    %753 = vmatprep.subr.mxu0 0.0
    %754 = vmatpush1.msra.mxu0 0.0
    %755 = vmatprep.subr.mxu0 0.0
    %756 = vmatpush1.msra.mxu0 0.0
    %757 = vmatprep.subr.mxu0 0.0
    %758 = vmatpush1.msra.mxu0 0.0
    %759 = vmatprep.mubr.f32.mxu0 0.0
    %760 = vmatmul.mubr.f32.gmra.mrb[0].mxu0 %v617
    %v761 = vpop.f32.mrb[0].mxu0
    %v762 = vadd.f32 %v452, %v761
    %v763 = vpop.f32.mrb[0].mxu0
    %764 = vdwg.mxu0
    %v765 = vadd.f32 %v621, %v691
    %v766 = vxor.u32 %v765, 2147483648
    %v767 = vmul.f32 %v766, 1.442695
    %v768 = vpow.pop %v767
    %v769 = vadd.f32 %v768, 1.0
    %v770 = vrcp.pop %v769
    %v771 = vmul.f32 1.0, %v770
    %v772 = vadd.f32 %v622, %v693
    %v773 = vxor.u32 %v772, 2147483648
    %v774 = vmul.f32 %v773, 1.442695
    %v775 = vpow.pop %v774
    %v776 = vadd.f32 %v775, 1.0
    %v777 = vrcp.pop %v776
    %v778 = vmul.f32 1.0, %v777
    %v779 = vmul.f32 %v771, %v762
    %v780 = vadd.f32 %v623, %v779
    %v781 = vtanh.pop %v780
    %v782 = vsub.f32 1.0, %v778
    %v783 = vmul.f32 %v782, %v781
    %v784 = vmul.f32 %v778, %v617
    %v785 = vadd.f32 %v783, %v784
    %s786 = smul.u32 5, 3
    %s787 = smul.addr %s786, 8
    %s788 = scalar_lea.vmem [#allocation2], %s787
    %v789 = vld [vmem:[%s788] sm:$0xff]
    %v790 = vld [vmem:[%s788 + $0x8] sm:$0xff]
    %v791 = vld [vmem:[%s788 + $0x10] sm:$0xff]
    %792 = vmatprep.subr.mxu0 %v392
    %793 = vmatpush1.msra.mxu0 %v391
    %794 = vmatprep.subr.mxu0 %v395
    %795 = vmatpush1.msra.mxu0 %v394
    %796 = vmatprep.subr.mxu0 %v398
    %797 = vmatpush1.msra.mxu0 %v397
    %798 = vmatprep.subr.mxu0 %v401
    %799 = vmatpush1.msra.mxu0 %v400
    %800 = vmatprep.subr.mxu0 %v404
    %801 = vmatpush1.msra.mxu0 %v403
    %802 = vmatprep.subr.mxu0 %v407
    %803 = vmatpush1.msra.mxu0 %v406
    %804 = vmatprep.subr.mxu0 %v410
    %805 = vmatpush1.msra.mxu0 %v409
    %806 = vmatprep.subr.mxu0 %v413
    %807 = vmatpush1.msra.mxu0 %v412
    %808 = vmatprep.subr.mxu0 %v416
    %809 = vmatpush1.msra.mxu0 %v415
    %810 = vmatprep.subr.mxu0 %v419
    %811 = vmatpush1.msra.mxu0 %v418
    %812 = vmatprep.subr.mxu0 %v422
    %813 = vmatpush1.msra.mxu0 %v421
    %814 = vmatprep.subr.mxu0 %v425
    %815 = vmatpush1.msra.mxu0 %v424
    %816 = vmatprep.subr.mxu0 %v428
    %817 = vmatpush1.msra.mxu0 %v427
    %818 = vmatprep.subr.mxu0 %v431
    %819 = vmatpush1.msra.mxu0 %v430
    %820 = vmatprep.subr.mxu0 %v434
    %821 = vmatpush1.msra.mxu0 %v433
    %822 = vmatprep.subr.mxu0 %v437
    %823 = vmatpush1.msra.mxu0 %v436
    %824 = vmatprep.subr.mxu0 0.0
    %825 = vmatpush1.msra.mxu0 0.0
    %826 = vmatprep.subr.mxu0 0.0
    %827 = vmatpush1.msra.mxu0 0.0
    %828 = vmatprep.subr.mxu0 0.0
    %829 = vmatpush1.msra.mxu0 0.0
    %830 = vmatprep.subr.mxu0 0.0
    %831 = vmatpush1.msra.mxu0 0.0
    %832 = vmatprep.subr.mxu0 0.0
    %833 = vmatpush1.msra.mxu0 0.0
    %834 = vmatprep.subr.mxu0 0.0
    %835 = vmatpush1.msra.mxu0 0.0
    %836 = vmatprep.subr.mxu0 0.0
    %837 = vmatpush1.msra.mxu0 0.0
    %838 = vmatprep.subr.mxu0 0.0
    %839 = vmatpush1.msra.mxu0 0.0
    %840 = vmatprep.subr.mxu0 0.0
    %841 = vmatpush1.msra.mxu0 0.0
    %842 = vmatprep.subr.mxu0 0.0
    %843 = vmatpush1.msra.mxu0 0.0
    %844 = vmatprep.subr.mxu0 0.0
    %845 = vmatpush1.msra.mxu0 0.0
    %846 = vmatprep.subr.mxu0 0.0
    %847 = vmatpush1.msra.mxu0 0.0
    %848 = vmatprep.subr.mxu0 0.0
    %849 = vmatpush1.msra.mxu0 0.0
    %850 = vmatprep.subr.mxu0 0.0
    %851 = vmatpush1.msra.mxu0 0.0
    %852 = vmatprep.subr.mxu0 0.0
    %853 = vmatpush1.msra.mxu0 0.0
    %854 = vmatprep.subr.mxu0 0.0
    %855 = vmatpush1.msra.mxu0 0.0
    %856 = vmatprep.mubr.f32.mxu0 0.0
    %857 = vmatmul.mubr.f32.gmra.mrb[0].mxu0 %v785
    %v858 = vpop.f32.mrb[0].mxu0
    %v859 = vadd.f32 %v444, %v858
    %v860 = vpop.f32.mrb[0].mxu0
    %v861 = vadd.f32 %v448, %v860
    %862 = vdwg.mxu0
    %863 = vmatprep.subr.mxu0 0.0
    %864 = vmatpush1.msra.mxu0 %v393
    %865 = vmatprep.subr.mxu0 0.0
    %866 = vmatpush1.msra.mxu0 %v396
    %867 = vmatprep.subr.mxu0 0.0
    %868 = vmatpush1.msra.mxu0 %v399
    %869 = vmatprep.subr.mxu0 0.0
    %870 = vmatpush1.msra.mxu0 %v402
    %871 = vmatprep.subr.mxu0 0.0
    %872 = vmatpush1.msra.mxu0 %v405
    %873 = vmatprep.subr.mxu0 0.0
    %874 = vmatpush1.msra.mxu0 %v408
    %875 = vmatprep.subr.mxu0 0.0
    %876 = vmatpush1.msra.mxu0 %v411
    %877 = vmatprep.subr.mxu0 0.0
    %878 = vmatpush1.msra.mxu0 %v414
    %879 = vmatprep.subr.mxu0 0.0
    %880 = vmatpush1.msra.mxu0 %v417
    %881 = vmatprep.subr.mxu0 0.0
    %882 = vmatpush1.msra.mxu0 %v420
    %883 = vmatprep.subr.mxu0 0.0
    %884 = vmatpush1.msra.mxu0 %v423
    %885 = vmatprep.subr.mxu0 0.0
    %886 = vmatpush1.msra.mxu0 %v426
    %887 = vmatprep.subr.mxu0 0.0
    %888 = vmatpush1.msra.mxu0 %v429
    %889 = vmatprep.subr.mxu0 0.0
    %890 = vmatpush1.msra.mxu0 %v432
    %891 = vmatprep.subr.mxu0 0.0
    %892 = vmatpush1.msra.mxu0 %v435
    %893 = vmatprep.subr.mxu0 0.0
    %894 = vmatpush1.msra.mxu0 %v438
    %895 = vmatprep.subr.mxu0 0.0
    %896 = vmatpush1.msra.mxu0 0.0
    %897 = vmatprep.subr.mxu0 0.0
    %898 = vmatpush1.msra.mxu0 0.0
    %899 = vmatprep.subr.mxu0 0.0
    %900 = vmatpush1.msra.mxu0 0.0
    %901 = vmatprep.subr.mxu0 0.0
    %902 = vmatpush1.msra.mxu0 0.0
    %903 = vmatprep.subr.mxu0 0.0
    %904 = vmatpush1.msra.mxu0 0.0
    %905 = vmatprep.subr.mxu0 0.0
    %906 = vmatpush1.msra.mxu0 0.0
    %907 = vmatprep.subr.mxu0 0.0
    %908 = vmatpush1.msra.mxu0 0.0
    %909 = vmatprep.subr.mxu0 0.0
    %910 = vmatpush1.msra.mxu0 0.0
    %911 = vmatprep.subr.mxu0 0.0
    %912 = vmatpush1.msra.mxu0 0.0
    %913 = vmatprep.subr.mxu0 0.0
    %914 = vmatpush1.msra.mxu0 0.0
    %915 = vmatprep.subr.mxu0 0.0
    %916 = vmatpush1.msra.mxu0 0.0
    %917 = vmatprep.subr.mxu0 0.0
    %918 = vmatpush1.msra.mxu0 0.0
    %919 = vmatprep.subr.mxu0 0.0
    %920 = vmatpush1.msra.mxu0 0.0
    %921 = vmatprep.subr.mxu0 0.0
    %922 = vmatpush1.msra.mxu0 0.0
    %923 = vmatprep.subr.mxu0 0.0
    %924 = vmatpush1.msra.mxu0 0.0
    %925 = vmatprep.subr.mxu0 0.0
    %926 = vmatpush1.msra.mxu0 0.0
    %927 = vmatprep.mubr.f32.mxu0 0.0
    %928 = vmatmul.mubr.f32.gmra.mrb[0].mxu0 %v785
    %v929 = vpop.f32.mrb[0].mxu0
    %v930 = vadd.f32 %v452, %v929
    %v931 = vpop.f32.mrb[0].mxu0
    %932 = vdwg.mxu0
    %v933 = vadd.f32 %v789, %v859
    %v934 = vxor.u32 %v933, 2147483648
    %v935 = vmul.f32 %v934, 1.442695
    %v936 = vpow.pop %v935
    %v937 = vadd.f32 %v936, 1.0
    %v938 = vrcp.pop %v937
    %v939 = vmul.f32 1.0, %v938
    %v940 = vadd.f32 %v790, %v861
    %v941 = vxor.u32 %v940, 2147483648
    %v942 = vmul.f32 %v941, 1.442695
    %v943 = vpow.pop %v942
    %v944 = vadd.f32 %v943, 1.0
    %v945 = vrcp.pop %v944
    %v946 = vmul.f32 1.0, %v945
    %v947 = vmul.f32 %v939, %v930
    %v948 = vadd.f32 %v791, %v947
    %v949 = vtanh.pop %v948
    %v950 = vsub.f32 1.0, %v946
    %v951 = vmul.f32 %v950, %v949
    %v952 = vmul.f32 %v946, %v785
    %v953 = vadd.f32 %v951, %v952
    %s954 = smul.u32 4, 3
    %s955 = smul.addr %s954, 8
    %s956 = scalar_lea.vmem [#allocation2], %s955
    %v957 = vld [vmem:[%s956] sm:$0xff]
    %v958 = vld [vmem:[%s956 + $0x8] sm:$0xff]
    %v959 = vld [vmem:[%s956 + $0x10] sm:$0xff]
    %960 = vmatprep.subr.mxu0 %v392
    %961 = vmatpush1.msra.mxu0 %v391
    %962 = vmatprep.subr.mxu0 %v395
    %963 = vmatpush1.msra.mxu0 %v394
    %964 = vmatprep.subr.mxu0 %v398
    %965 = vmatpush1.msra.mxu0 %v397
    %966 = vmatprep.subr.mxu0 %v401
    %967 = vmatpush1.msra.mxu0 %v400
    %968 = vmatprep.subr.mxu0 %v404
    %969 = vmatpush1.msra.mxu0 %v403
    %970 = vmatprep.subr.mxu0 %v407
    %971 = vmatpush1.msra.mxu0 %v406
    %972 = vmatprep.subr.mxu0 %v410
    %973 = vmatpush1.msra.mxu0 %v409
    %974 = vmatprep.subr.mxu0 %v413
    %975 = vmatpush1.msra.mxu0 %v412
    %976 = vmatprep.subr.mxu0 %v416
    %977 = vmatpush1.msra.mxu0 %v415
    %978 = vmatprep.subr.mxu0 %v419
    %979 = vmatpush1.msra.mxu0 %v418
    %980 = vmatprep.subr.mxu0 %v422
    %981 = vmatpush1.msra.mxu0 %v421
    %982 = vmatprep.subr.mxu0 %v425
    %983 = vmatpush1.msra.mxu0 %v424
    %984 = vmatprep.subr.mxu0 %v428
    %985 = vmatpush1.msra.mxu0 %v427
    %986 = vmatprep.subr.mxu0 %v431
    %987 = vmatpush1.msra.mxu0 %v430
    %988 = vmatprep.subr.mxu0 %v434
    %989 = vmatpush1.msra.mxu0 %v433
    %990 = vmatprep.subr.mxu0 %v437
    %991 = vmatpush1.msra.mxu0 %v436
    %992 = vmatprep.subr.mxu0 0.0
    %993 = vmatpush1.msra.mxu0 0.0
    %994 = vmatprep.subr.mxu0 0.0
    %995 = vmatpush1.msra.mxu0 0.0
    %996 = vmatprep.subr.mxu0 0.0
    %997 = vmatpush1.msra.mxu0 0.0
    %998 = vmatprep.subr.mxu0 0.0
    %999 = vmatpush1.msra.mxu0 0.0
    %1000 = vmatprep.subr.mxu0 0.0
    %1001 = vmatpush1.msra.mxu0 0.0
    %1002 = vmatprep.subr.mxu0 0.0
    %1003 = vmatpush1.msra.mxu0 0.0
    %1004 = vmatprep.subr.mxu0 0.0
    %1005 = vmatpush1.msra.mxu0 0.0
    %1006 = vmatprep.subr.mxu0 0.0
    %1007 = vmatpush1.msra.mxu0 0.0
    %1008 = vmatprep.subr.mxu0 0.0
    %1009 = vmatpush1.msra.mxu0 0.0
    %1010 = vmatprep.subr.mxu0 0.0
    %1011 = vmatpush1.msra.mxu0 0.0
    %1012 = vmatprep.subr.mxu0 0.0
    %1013 = vmatpush1.msra.mxu0 0.0
    %1014 = vmatprep.subr.mxu0 0.0
    %1015 = vmatpush1.msra.mxu0 0.0
    %1016 = vmatprep.subr.mxu0 0.0
    %1017 = vmatpush1.msra.mxu0 0.0
    %1018 = vmatprep.subr.mxu0 0.0
    %1019 = vmatpush1.msra.mxu0 0.0
    %1020 = vmatprep.subr.mxu0 0.0
    %1021 = vmatpush1.msra.mxu0 0.0
    %1022 = vmatprep.subr.mxu0 0.0
    %1023 = vmatpush1.msra.mxu0 0.0
    %1024 = vmatprep.mubr.f32.mxu0 0.0
    %1025 = vmatmul.mubr.f32.gmra.mrb[0].mxu0 %v953
    %v1026 = vpop.f32.mrb[0].mxu0
    %v1027 = vadd.f32 %v444, %v1026
    %v1028 = vpop.f32.mrb[0].mxu0
    %v1029 = vadd.f32 %v448, %v1028
    %1030 = vdwg.mxu0
    %1031 = vmatprep.subr.mxu0 0.0
    %1032 = vmatpush1.msra.mxu0 %v393
    %1033 = vmatprep.subr.mxu0 0.0
    %1034 = vmatpush1.msra.mxu0 %v396
    %1035 = vmatprep.subr.mxu0 0.0
    %1036 = vmatpush1.msra.mxu0 %v399
    %1037 = vmatprep.subr.mxu0 0.0
    %1038 = vmatpush1.msra.mxu0 %v402
    %1039 = vmatprep.subr.mxu0 0.0
    %1040 = vmatpush1.msra.mxu0 %v405
    %1041 = vmatprep.subr.mxu0 0.0
    %1042 = vmatpush1.msra.mxu0 %v408
    %1043 = vmatprep.subr.mxu0 0.0
    %1044 = vmatpush1.msra.mxu0 %v411
    %1045 = vmatprep.subr.mxu0 0.0
    %1046 = vmatpush1.msra.mxu0 %v414
    %1047 = vmatprep.subr.mxu0 0.0
    %1048 = vmatpush1.msra.mxu0 %v417
    %1049 = vmatprep.subr.mxu0 0.0
    %1050 = vmatpush1.msra.mxu0 %v420
    %1051 = vmatprep.subr.mxu0 0.0
    %1052 = vmatpush1.msra.mxu0 %v423
    %1053 = vmatprep.subr.mxu0 0.0
    %1054 = vmatpush1.msra.mxu0 %v426
    %1055 = vmatprep.subr.mxu0 0.0
    %1056 = vmatpush1.msra.mxu0 %v429
    %1057 = vmatprep.subr.mxu0 0.0
    %1058 = vmatpush1.msra.mxu0 %v432
    %1059 = vmatprep.subr.mxu0 0.0
    %1060 = vmatpush1.msra.mxu0 %v435
    %1061 = vmatprep.subr.mxu0 0.0
    %1062 = vmatpush1.msra.mxu0 %v438
    %1063 = vmatprep.subr.mxu0 0.0
    %1064 = vmatpush1.msra.mxu0 0.0
    %1065 = vmatprep.subr.mxu0 0.0
    %1066 = vmatpush1.msra.mxu0 0.0
    %1067 = vmatprep.subr.mxu0 0.0
    %1068 = vmatpush1.msra.mxu0 0.0
    %1069 = vmatprep.subr.mxu0 0.0
    %1070 = vmatpush1.msra.mxu0 0.0
    %1071 = vmatprep.subr.mxu0 0.0
    %1072 = vmatpush1.msra.mxu0 0.0
    %1073 = vmatprep.subr.mxu0 0.0
    %1074 = vmatpush1.msra.mxu0 0.0
    %1075 = vmatprep.subr.mxu0 0.0
    %1076 = vmatpush1.msra.mxu0 0.0
    %1077 = vmatprep.subr.mxu0 0.0
    %1078 = vmatpush1.msra.mxu0 0.0
    %1079 = vmatprep.subr.mxu0 0.0
    %1080 = vmatpush1.msra.mxu0 0.0
    %1081 = vmatprep.subr.mxu0 0.0
    %1082 = vmatpush1.msra.mxu0 0.0
    %1083 = vmatprep.subr.mxu0 0.0
    %1084 = vmatpush1.msra.mxu0 0.0
    %1085 = vmatprep.subr.mxu0 0.0
    %1086 = vmatpush1.msra.mxu0 0.0
    %1087 = vmatprep.subr.mxu0 0.0
    %1088 = vmatpush1.msra.mxu0 0.0
    %1089 = vmatprep.subr.mxu0 0.0
    %1090 = vmatpush1.msra.mxu0 0.0
    %1091 = vmatprep.subr.mxu0 0.0
    %1092 = vmatpush1.msra.mxu0 0.0
    %1093 = vmatprep.subr.mxu0 0.0
    %1094 = vmatpush1.msra.mxu0 0.0
    %1095 = vmatprep.mubr.f32.mxu0 0.0
    %1096 = vmatmul.mubr.f32.gmra.mrb[0].mxu0 %v953
    %v1097 = vpop.f32.mrb[0].mxu0
    %v1098 = vadd.f32 %v452, %v1097
    %v1099 = vpop.f32.mrb[0].mxu0
    %1100 = vdwg.mxu0
    %v1101 = vadd.f32 %v957, %v1027
    %v1102 = vxor.u32 %v1101, 2147483648
    %v1103 = vmul.f32 %v1102, 1.442695
    %v1104 = vpow.pop %v1103
    %v1105 = vadd.f32 %v1104, 1.0
    %v1106 = vrcp.pop %v1105
    %v1107 = vmul.f32 1.0, %v1106
    %v1108 = vadd.f32 %v958, %v1029
    %v1109 = vxor.u32 %v1108, 2147483648
    %v1110 = vmul.f32 %v1109, 1.442695
    %v1111 = vpow.pop %v1110
    %v1112 = vadd.f32 %v1111, 1.0
    %v1113 = vrcp.pop %v1112
    %v1114 = vmul.f32 1.0, %v1113
    %v1115 = vmul.f32 %v1107, %v1098
    %v1116 = vadd.f32 %v959, %v1115
    %v1117 = vtanh.pop %v1116
    %v1118 = vsub.f32 1.0, %v1114
    %v1119 = vmul.f32 %v1118, %v1117
    %v1120 = vmul.f32 %v1114, %v953
    %v1121 = vadd.f32 %v1119, %v1120
    %s1122 = smul.u32 3, 3
    %s1123 = smul.addr %s1122, 8
    %s1124 = scalar_lea.vmem [#allocation2], %s1123
    %v1125 = vld [vmem:[%s1124] sm:$0xff]
    %v1126 = vld [vmem:[%s1124 + $0x8] sm:$0xff]
    %v1127 = vld [vmem:[%s1124 + $0x10] sm:$0xff]
    %1128 = vmatprep.subr.mxu0 %v392
    %1129 = vmatpush1.msra.mxu0 %v391
    %1130 = vmatprep.subr.mxu0 %v395
    %1131 = vmatpush1.msra.mxu0 %v394
    %1132 = vmatprep.subr.mxu0 %v398
    %1133 = vmatpush1.msra.mxu0 %v397
    %1134 = vmatprep.subr.mxu0 %v401
    %1135 = vmatpush1.msra.mxu0 %v400
    %1136 = vmatprep.subr.mxu0 %v404
    %1137 = vmatpush1.msra.mxu0 %v403
    %1138 = vmatprep.subr.mxu0 %v407
    %1139 = vmatpush1.msra.mxu0 %v406
    %1140 = vmatprep.subr.mxu0 %v410
    %1141 = vmatpush1.msra.mxu0 %v409
    %1142 = vmatprep.subr.mxu0 %v413
    %1143 = vmatpush1.msra.mxu0 %v412
    %1144 = vmatprep.subr.mxu0 %v416
    %1145 = vmatpush1.msra.mxu0 %v415
    %1146 = vmatprep.subr.mxu0 %v419
    %1147 = vmatpush1.msra.mxu0 %v418
    %1148 = vmatprep.subr.mxu0 %v422
    %1149 = vmatpush1.msra.mxu0 %v421
    %1150 = vmatprep.subr.mxu0 %v425
    %1151 = vmatpush1.msra.mxu0 %v424
    %1152 = vmatprep.subr.mxu0 %v428
    %1153 = vmatpush1.msra.mxu0 %v427
    %1154 = vmatprep.subr.mxu0 %v431
    %1155 = vmatpush1.msra.mxu0 %v430
    %1156 = vmatprep.subr.mxu0 %v434
    %1157 = vmatpush1.msra.mxu0 %v433
    %1158 = vmatprep.subr.mxu0 %v437
    %1159 = vmatpush1.msra.mxu0 %v436
    %1160 = vmatprep.subr.mxu0 0.0
    %1161 = vmatpush1.msra.mxu0 0.0
    %1162 = vmatprep.subr.mxu0 0.0
    %1163 = vmatpush1.msra.mxu0 0.0
    %1164 = vmatprep.subr.mxu0 0.0
    %1165 = vmatpush1.msra.mxu0 0.0
    %1166 = vmatprep.subr.mxu0 0.0
    %1167 = vmatpush1.msra.mxu0 0.0
    %1168 = vmatprep.subr.mxu0 0.0
    %1169 = vmatpush1.msra.mxu0 0.0
    %1170 = vmatprep.subr.mxu0 0.0
    %1171 = vmatpush1.msra.mxu0 0.0
    %1172 = vmatprep.subr.mxu0 0.0
    %1173 = vmatpush1.msra.mxu0 0.0
    %1174 = vmatprep.subr.mxu0 0.0
    %1175 = vmatpush1.msra.mxu0 0.0
    %1176 = vmatprep.subr.mxu0 0.0
    %1177 = vmatpush1.msra.mxu0 0.0
    %1178 = vmatprep.subr.mxu0 0.0
    %1179 = vmatpush1.msra.mxu0 0.0
    %1180 = vmatprep.subr.mxu0 0.0
    %1181 = vmatpush1.msra.mxu0 0.0
    %1182 = vmatprep.subr.mxu0 0.0
    %1183 = vmatpush1.msra.mxu0 0.0
    %1184 = vmatprep.subr.mxu0 0.0
    %1185 = vmatpush1.msra.mxu0 0.0
    %1186 = vmatprep.subr.mxu0 0.0
    %1187 = vmatpush1.msra.mxu0 0.0
    %1188 = vmatprep.subr.mxu0 0.0
    %1189 = vmatpush1.msra.mxu0 0.0
    %1190 = vmatprep.subr.mxu0 0.0
    %1191 = vmatpush1.msra.mxu0 0.0
    %1192 = vmatprep.mubr.f32.mxu0 0.0
    %1193 = vmatmul.mubr.f32.gmra.mrb[0].mxu0 %v1121
    %v1194 = vpop.f32.mrb[0].mxu0
    %v1195 = vadd.f32 %v444, %v1194
    %v1196 = vpop.f32.mrb[0].mxu0
    %v1197 = vadd.f32 %v448, %v1196
    %1198 = vdwg.mxu0
    %1199 = vmatprep.subr.mxu0 0.0
    %1200 = vmatpush1.msra.mxu0 %v393
    %1201 = vmatprep.subr.mxu0 0.0
    %1202 = vmatpush1.msra.mxu0 %v396
    %1203 = vmatprep.subr.mxu0 0.0
    %1204 = vmatpush1.msra.mxu0 %v399
    %1205 = vmatprep.subr.mxu0 0.0
    %1206 = vmatpush1.msra.mxu0 %v402
    %1207 = vmatprep.subr.mxu0 0.0
    %1208 = vmatpush1.msra.mxu0 %v405
    %1209 = vmatprep.subr.mxu0 0.0
    %1210 = vmatpush1.msra.mxu0 %v408
    %1211 = vmatprep.subr.mxu0 0.0
    %1212 = vmatpush1.msra.mxu0 %v411
    %1213 = vmatprep.subr.mxu0 0.0
    %1214 = vmatpush1.msra.mxu0 %v414
    %1215 = vmatprep.subr.mxu0 0.0
    %1216 = vmatpush1.msra.mxu0 %v417
    %1217 = vmatprep.subr.mxu0 0.0
    %1218 = vmatpush1.msra.mxu0 %v420
    %1219 = vmatprep.subr.mxu0 0.0
    %1220 = vmatpush1.msra.mxu0 %v423
    %1221 = vmatprep.subr.mxu0 0.0
    %1222 = vmatpush1.msra.mxu0 %v426
    %1223 = vmatprep.subr.mxu0 0.0
    %1224 = vmatpush1.msra.mxu0 %v429
    %1225 = vmatprep.subr.mxu0 0.0
    %1226 = vmatpush1.msra.mxu0 %v432
    %1227 = vmatprep.subr.mxu0 0.0
    %1228 = vmatpush1.msra.mxu0 %v435
    %1229 = vmatprep.subr.mxu0 0.0
    %1230 = vmatpush1.msra.mxu0 %v438
    %1231 = vmatprep.subr.mxu0 0.0
    %1232 = vmatpush1.msra.mxu0 0.0
    %1233 = vmatprep.subr.mxu0 0.0
    %1234 = vmatpush1.msra.mxu0 0.0
    %1235 = vmatprep.subr.mxu0 0.0
    %1236 = vmatpush1.msra.mxu0 0.0
    %1237 = vmatprep.subr.mxu0 0.0
    %1238 = vmatpush1.msra.mxu0 0.0
    %1239 = vmatprep.subr.mxu0 0.0
    %1240 = vmatpush1.msra.mxu0 0.0
    %1241 = vmatprep.subr.mxu0 0.0
    %1242 = vmatpush1.msra.mxu0 0.0
    %1243 = vmatprep.subr.mxu0 0.0
    %1244 = vmatpush1.msra.mxu0 0.0
    %1245 = vmatprep.subr.mxu0 0.0
    %1246 = vmatpush1.msra.mxu0 0.0
    %1247 = vmatprep.subr.mxu0 0.0
    %1248 = vmatpush1.msra.mxu0 0.0
    %1249 = vmatprep.subr.mxu0 0.0
    %1250 = vmatpush1.msra.mxu0 0.0
    %1251 = vmatprep.subr.mxu0 0.0
    %1252 = vmatpush1.msra.mxu0 0.0
    %1253 = vmatprep.subr.mxu0 0.0
    %1254 = vmatpush1.msra.mxu0 0.0
    %1255 = vmatprep.subr.mxu0 0.0
    %1256 = vmatpush1.msra.mxu0 0.0
    %1257 = vmatprep.subr.mxu0 0.0
    %1258 = vmatpush1.msra.mxu0 0.0
    %1259 = vmatprep.subr.mxu0 0.0
    %1260 = vmatpush1.msra.mxu0 0.0
    %1261 = vmatprep.subr.mxu0 0.0
    %1262 = vmatpush1.msra.mxu0 0.0
    %1263 = vmatprep.mubr.f32.mxu0 0.0
    %1264 = vmatmul.mubr.f32.gmra.mrb[0].mxu0 %v1121
    %v1265 = vpop.f32.mrb[0].mxu0
    %v1266 = vadd.f32 %v452, %v1265
    %v1267 = vpop.f32.mrb[0].mxu0
    %1268 = vdwg.mxu0
    %v1269 = vadd.f32 %v1125, %v1195
    %v1270 = vxor.u32 %v1269, 2147483648
    %v1271 = vmul.f32 %v1270, 1.442695
    %v1272 = vpow.pop %v1271
    %v1273 = vadd.f32 %v1272, 1.0
    %v1274 = vrcp.pop %v1273
    %v1275 = vmul.f32 1.0, %v1274
    %v1276 = vadd.f32 %v1126, %v1197
    %v1277 = vxor.u32 %v1276, 2147483648
    %v1278 = vmul.f32 %v1277, 1.442695
    %v1279 = vpow.pop %v1278
    %v1280 = vadd.f32 %v1279, 1.0
    %v1281 = vrcp.pop %v1280
    %v1282 = vmul.f32 1.0, %v1281
    %v1283 = vmul.f32 %v1275, %v1266
    %v1284 = vadd.f32 %v1127, %v1283
    %v1285 = vtanh.pop %v1284
    %v1286 = vsub.f32 1.0, %v1282
    %v1287 = vmul.f32 %v1286, %v1285
    %v1288 = vmul.f32 %v1282, %v1121
    %v1289 = vadd.f32 %v1287, %v1288
    %s1290 = smul.u32 2, 3
    %s1291 = smul.addr %s1290, 8
    %s1292 = scalar_lea.vmem [#allocation2], %s1291
    %v1293 = vld [vmem:[%s1292] sm:$0xff]
    %v1294 = vld [vmem:[%s1292 + $0x8] sm:$0xff]
    %v1295 = vld [vmem:[%s1292 + $0x10] sm:$0xff]
    %1296 = vmatprep.subr.mxu0 %v392
    %1297 = vmatpush1.msra.mxu0 %v391
    %1298 = vmatprep.subr.mxu0 %v395
    %1299 = vmatpush1.msra.mxu0 %v394
    %1300 = vmatprep.subr.mxu0 %v398
    %1301 = vmatpush1.msra.mxu0 %v397
    %1302 = vmatprep.subr.mxu0 %v401
    %1303 = vmatpush1.msra.mxu0 %v400
    %1304 = vmatprep.subr.mxu0 %v404
    %1305 = vmatpush1.msra.mxu0 %v403
    %1306 = vmatprep.subr.mxu0 %v407
    %1307 = vmatpush1.msra.mxu0 %v406
    %1308 = vmatprep.subr.mxu0 %v410
    %1309 = vmatpush1.msra.mxu0 %v409
    %1310 = vmatprep.subr.mxu0 %v413
    %1311 = vmatpush1.msra.mxu0 %v412
    %1312 = vmatprep.subr.mxu0 %v416
    %1313 = vmatpush1.msra.mxu0 %v415
    %1314 = vmatprep.subr.mxu0 %v419
    %1315 = vmatpush1.msra.mxu0 %v418
    %1316 = vmatprep.subr.mxu0 %v422
    %1317 = vmatpush1.msra.mxu0 %v421
    %1318 = vmatprep.subr.mxu0 %v425
    %1319 = vmatpush1.msra.mxu0 %v424
    %1320 = vmatprep.subr.mxu0 %v428
    %1321 = vmatpush1.msra.mxu0 %v427
    %1322 = vmatprep.subr.mxu0 %v431
    %1323 = vmatpush1.msra.mxu0 %v430
    %1324 = vmatprep.subr.mxu0 %v434
    %1325 = vmatpush1.msra.mxu0 %v433
    %1326 = vmatprep.subr.mxu0 %v437
    %1327 = vmatpush1.msra.mxu0 %v436
    %1328 = vmatprep.subr.mxu0 0.0
    %1329 = vmatpush1.msra.mxu0 0.0
    %1330 = vmatprep.subr.mxu0 0.0
    %1331 = vmatpush1.msra.mxu0 0.0
    %1332 = vmatprep.subr.mxu0 0.0
    %1333 = vmatpush1.msra.mxu0 0.0
    %1334 = vmatprep.subr.mxu0 0.0
    %1335 = vmatpush1.msra.mxu0 0.0
    %1336 = vmatprep.subr.mxu0 0.0
    %1337 = vmatpush1.msra.mxu0 0.0
    %1338 = vmatprep.subr.mxu0 0.0
    %1339 = vmatpush1.msra.mxu0 0.0
    %1340 = vmatprep.subr.mxu0 0.0
    %1341 = vmatpush1.msra.mxu0 0.0
    %1342 = vmatprep.subr.mxu0 0.0
    %1343 = vmatpush1.msra.mxu0 0.0
    %1344 = vmatprep.subr.mxu0 0.0
    %1345 = vmatpush1.msra.mxu0 0.0
    %1346 = vmatprep.subr.mxu0 0.0
    %1347 = vmatpush1.msra.mxu0 0.0
    %1348 = vmatprep.subr.mxu0 0.0
    %1349 = vmatpush1.msra.mxu0 0.0
    %1350 = vmatprep.subr.mxu0 0.0
    %1351 = vmatpush1.msra.mxu0 0.0
    %1352 = vmatprep.subr.mxu0 0.0
    %1353 = vmatpush1.msra.mxu0 0.0
    %1354 = vmatprep.subr.mxu0 0.0
    %1355 = vmatpush1.msra.mxu0 0.0
    %1356 = vmatprep.subr.mxu0 0.0
    %1357 = vmatpush1.msra.mxu0 0.0
    %1358 = vmatprep.subr.mxu0 0.0
    %1359 = vmatpush1.msra.mxu0 0.0
    %1360 = vmatprep.mubr.f32.mxu0 0.0
    %1361 = vmatmul.mubr.f32.gmra.mrb[0].mxu0 %v1289
    %v1362 = vpop.f32.mrb[0].mxu0
    %v1363 = vadd.f32 %v444, %v1362
    %v1364 = vpop.f32.mrb[0].mxu0
    %v1365 = vadd.f32 %v448, %v1364
    %1366 = vdwg.mxu0
    %1367 = vmatprep.subr.mxu0 0.0
    %1368 = vmatpush1.msra.mxu0 %v393
    %1369 = vmatprep.subr.mxu0 0.0
    %1370 = vmatpush1.msra.mxu0 %v396
    %1371 = vmatprep.subr.mxu0 0.0
    %1372 = vmatpush1.msra.mxu0 %v399
    %1373 = vmatprep.subr.mxu0 0.0
    %1374 = vmatpush1.msra.mxu0 %v402
    %1375 = vmatprep.subr.mxu0 0.0
    %1376 = vmatpush1.msra.mxu0 %v405
    %1377 = vmatprep.subr.mxu0 0.0
    %1378 = vmatpush1.msra.mxu0 %v408
    %1379 = vmatprep.subr.mxu0 0.0
    %1380 = vmatpush1.msra.mxu0 %v411
    %1381 = vmatprep.subr.mxu0 0.0
    %1382 = vmatpush1.msra.mxu0 %v414
    %1383 = vmatprep.subr.mxu0 0.0
    %1384 = vmatpush1.msra.mxu0 %v417
    %1385 = vmatprep.subr.mxu0 0.0
    %1386 = vmatpush1.msra.mxu0 %v420
    %1387 = vmatprep.subr.mxu0 0.0
    %1388 = vmatpush1.msra.mxu0 %v423
    %1389 = vmatprep.subr.mxu0 0.0
    %1390 = vmatpush1.msra.mxu0 %v426
    %1391 = vmatprep.subr.mxu0 0.0
    %1392 = vmatpush1.msra.mxu0 %v429
    %1393 = vmatprep.subr.mxu0 0.0
    %1394 = vmatpush1.msra.mxu0 %v432
    %1395 = vmatprep.subr.mxu0 0.0
    %1396 = vmatpush1.msra.mxu0 %v435
    %1397 = vmatprep.subr.mxu0 0.0
    %1398 = vmatpush1.msra.mxu0 %v438
    %1399 = vmatprep.subr.mxu0 0.0
    %1400 = vmatpush1.msra.mxu0 0.0
    %1401 = vmatprep.subr.mxu0 0.0
    %1402 = vmatpush1.msra.mxu0 0.0
    %1403 = vmatprep.subr.mxu0 0.0
    %1404 = vmatpush1.msra.mxu0 0.0
    %1405 = vmatprep.subr.mxu0 0.0
    %1406 = vmatpush1.msra.mxu0 0.0
    %1407 = vmatprep.subr.mxu0 0.0
    %1408 = vmatpush1.msra.mxu0 0.0
    %1409 = vmatprep.subr.mxu0 0.0
    %1410 = vmatpush1.msra.mxu0 0.0
    %1411 = vmatprep.subr.mxu0 0.0
    %1412 = vmatpush1.msra.mxu0 0.0
    %1413 = vmatprep.subr.mxu0 0.0
    %1414 = vmatpush1.msra.mxu0 0.0
    %1415 = vmatprep.subr.mxu0 0.0
    %1416 = vmatpush1.msra.mxu0 0.0
    %1417 = vmatprep.subr.mxu0 0.0
    %1418 = vmatpush1.msra.mxu0 0.0
    %1419 = vmatprep.subr.mxu0 0.0
    %1420 = vmatpush1.msra.mxu0 0.0
    %1421 = vmatprep.subr.mxu0 0.0
    %1422 = vmatpush1.msra.mxu0 0.0
    %1423 = vmatprep.subr.mxu0 0.0
    %1424 = vmatpush1.msra.mxu0 0.0
    %1425 = vmatprep.subr.mxu0 0.0
    %1426 = vmatpush1.msra.mxu0 0.0
    %1427 = vmatprep.subr.mxu0 0.0
    %1428 = vmatpush1.msra.mxu0 0.0
    %1429 = vmatprep.subr.mxu0 0.0
    %1430 = vmatpush1.msra.mxu0 0.0
    %1431 = vmatprep.mubr.f32.mxu0 0.0
    %1432 = vmatmul.mubr.f32.gmra.mrb[0].mxu0 %v1289
    %v1433 = vpop.f32.mrb[0].mxu0
    %v1434 = vadd.f32 %v452, %v1433
    %v1435 = vpop.f32.mrb[0].mxu0
    %1436 = vdwg.mxu0
    %v1437 = vadd.f32 %v1293, %v1363
    %v1438 = vxor.u32 %v1437, 2147483648
    %v1439 = vmul.f32 %v1438, 1.442695
    %v1440 = vpow.pop %v1439
    %v1441 = vadd.f32 %v1440, 1.0
    %v1442 = vrcp.pop %v1441
    %v1443 = vmul.f32 1.0, %v1442
    %v1444 = vadd.f32 %v1294, %v1365
    %v1445 = vxor.u32 %v1444, 2147483648
    %v1446 = vmul.f32 %v1445, 1.442695
    %v1447 = vpow.pop %v1446
    %v1448 = vadd.f32 %v1447, 1.0
    %v1449 = vrcp.pop %v1448
    %v1450 = vmul.f32 1.0, %v1449
    %v1451 = vmul.f32 %v1443, %v1434
    %v1452 = vadd.f32 %v1295, %v1451
    %v1453 = vtanh.pop %v1452
    %v1454 = vsub.f32 1.0, %v1450
    %v1455 = vmul.f32 %v1454, %v1453
    %v1456 = vmul.f32 %v1450, %v1289
    %v1457 = vadd.f32 %v1455, %v1456
    %s1458 = smul.u32 1, 3
    %s1459 = smul.addr %s1458, 8
    %s1460 = scalar_lea.vmem [#allocation2], %s1459
    %v1461 = vld [vmem:[%s1460] sm:$0xff]
    %v1462 = vld [vmem:[%s1460 + $0x8] sm:$0xff]
    %v1463 = vld [vmem:[%s1460 + $0x10] sm:$0xff]
    %1464 = vmatprep.subr.mxu0 %v392
    %1465 = vmatpush1.msra.mxu0 %v391
    %1466 = vmatprep.subr.mxu0 %v395
    %1467 = vmatpush1.msra.mxu0 %v394
    %1468 = vmatprep.subr.mxu0 %v398
    %1469 = vmatpush1.msra.mxu0 %v397
    %1470 = vmatprep.subr.mxu0 %v401
    %1471 = vmatpush1.msra.mxu0 %v400
    %1472 = vmatprep.subr.mxu0 %v404
    %1473 = vmatpush1.msra.mxu0 %v403
    %1474 = vmatprep.subr.mxu0 %v407
    %1475 = vmatpush1.msra.mxu0 %v406
    %1476 = vmatprep.subr.mxu0 %v410
    %1477 = vmatpush1.msra.mxu0 %v409
    %1478 = vmatprep.subr.mxu0 %v413
    %1479 = vmatpush1.msra.mxu0 %v412
    %1480 = vmatprep.subr.mxu0 %v416
    %1481 = vmatpush1.msra.mxu0 %v415
    %1482 = vmatprep.subr.mxu0 %v419
    %1483 = vmatpush1.msra.mxu0 %v418
    %1484 = vmatprep.subr.mxu0 %v422
    %1485 = vmatpush1.msra.mxu0 %v421
    %1486 = vmatprep.subr.mxu0 %v425
    %1487 = vmatpush1.msra.mxu0 %v424
    %1488 = vmatprep.subr.mxu0 %v428
    %1489 = vmatpush1.msra.mxu0 %v427
    %1490 = vmatprep.subr.mxu0 %v431
    %1491 = vmatpush1.msra.mxu0 %v430
    %1492 = vmatprep.subr.mxu0 %v434
    %1493 = vmatpush1.msra.mxu0 %v433
    %1494 = vmatprep.subr.mxu0 %v437
    %1495 = vmatpush1.msra.mxu0 %v436
    %1496 = vmatprep.subr.mxu0 0.0
    %1497 = vmatpush1.msra.mxu0 0.0
    %1498 = vmatprep.subr.mxu0 0.0
    %1499 = vmatpush1.msra.mxu0 0.0
    %1500 = vmatprep.subr.mxu0 0.0
    %1501 = vmatpush1.msra.mxu0 0.0
    %1502 = vmatprep.subr.mxu0 0.0
    %1503 = vmatpush1.msra.mxu0 0.0
    %1504 = vmatprep.subr.mxu0 0.0
    %1505 = vmatpush1.msra.mxu0 0.0
    %1506 = vmatprep.subr.mxu0 0.0
    %1507 = vmatpush1.msra.mxu0 0.0
    %1508 = vmatprep.subr.mxu0 0.0
    %1509 = vmatpush1.msra.mxu0 0.0
    %1510 = vmatprep.subr.mxu0 0.0
    %1511 = vmatpush1.msra.mxu0 0.0
    %1512 = vmatprep.subr.mxu0 0.0
    %1513 = vmatpush1.msra.mxu0 0.0
    %1514 = vmatprep.subr.mxu0 0.0
    %1515 = vmatpush1.msra.mxu0 0.0
    %1516 = vmatprep.subr.mxu0 0.0
    %1517 = vmatpush1.msra.mxu0 0.0
    %1518 = vmatprep.subr.mxu0 0.0
    %1519 = vmatpush1.msra.mxu0 0.0
    %1520 = vmatprep.subr.mxu0 0.0
    %1521 = vmatpush1.msra.mxu0 0.0
    %1522 = vmatprep.subr.mxu0 0.0
    %1523 = vmatpush1.msra.mxu0 0.0
    %1524 = vmatprep.subr.mxu0 0.0
    %1525 = vmatpush1.msra.mxu0 0.0
    %1526 = vmatprep.subr.mxu0 0.0
    %1527 = vmatpush1.msra.mxu0 0.0
    %1528 = vmatprep.mubr.f32.mxu0 0.0
    %1529 = vmatmul.mubr.f32.gmra.mrb[0].mxu0 %v1457
    %v1530 = vpop.f32.mrb[0].mxu0
    %v1531 = vadd.f32 %v444, %v1530
    %v1532 = vpop.f32.mrb[0].mxu0
    %v1533 = vadd.f32 %v448, %v1532
    %1534 = vdwg.mxu0
    %1535 = vmatprep.subr.mxu0 0.0
    %1536 = vmatpush1.msra.mxu0 %v393
    %1537 = vmatprep.subr.mxu0 0.0
    %1538 = vmatpush1.msra.mxu0 %v396
    %1539 = vmatprep.subr.mxu0 0.0
    %1540 = vmatpush1.msra.mxu0 %v399
    %1541 = vmatprep.subr.mxu0 0.0
    %1542 = vmatpush1.msra.mxu0 %v402
    %1543 = vmatprep.subr.mxu0 0.0
    %1544 = vmatpush1.msra.mxu0 %v405
    %1545 = vmatprep.subr.mxu0 0.0
    %1546 = vmatpush1.msra.mxu0 %v408
    %1547 = vmatprep.subr.mxu0 0.0
    %1548 = vmatpush1.msra.mxu0 %v411
    %1549 = vmatprep.subr.mxu0 0.0
    %1550 = vmatpush1.msra.mxu0 %v414
    %1551 = vmatprep.subr.mxu0 0.0
    %1552 = vmatpush1.msra.mxu0 %v417
    %1553 = vmatprep.subr.mxu0 0.0
    %1554 = vmatpush1.msra.mxu0 %v420
    %1555 = vmatprep.subr.mxu0 0.0
    %1556 = vmatpush1.msra.mxu0 %v423
    %1557 = vmatprep.subr.mxu0 0.0
    %1558 = vmatpush1.msra.mxu0 %v426
    %1559 = vmatprep.subr.mxu0 0.0
    %1560 = vmatpush1.msra.mxu0 %v429
    %1561 = vmatprep.subr.mxu0 0.0
    %1562 = vmatpush1.msra.mxu0 %v432
    %1563 = vmatprep.subr.mxu0 0.0
    %1564 = vmatpush1.msra.mxu0 %v435
    %1565 = vmatprep.subr.mxu0 0.0
    %1566 = vmatpush1.msra.mxu0 %v438
    %1567 = vmatprep.subr.mxu0 0.0
    %1568 = vmatpush1.msra.mxu0 0.0
    %1569 = vmatprep.subr.mxu0 0.0
    %1570 = vmatpush1.msra.mxu0 0.0
    %1571 = vmatprep.subr.mxu0 0.0
    %1572 = vmatpush1.msra.mxu0 0.0
    %1573 = vmatprep.subr.mxu0 0.0
    %1574 = vmatpush1.msra.mxu0 0.0
    %1575 = vmatprep.subr.mxu0 0.0
    %1576 = vmatpush1.msra.mxu0 0.0
    %1577 = vmatprep.subr.mxu0 0.0
    %1578 = vmatpush1.msra.mxu0 0.0
    %1579 = vmatprep.subr.mxu0 0.0
    %1580 = vmatpush1.msra.mxu0 0.0
    %1581 = vmatprep.subr.mxu0 0.0
    %1582 = vmatpush1.msra.mxu0 0.0
    %1583 = vmatprep.subr.mxu0 0.0
    %1584 = vmatpush1.msra.mxu0 0.0
    %1585 = vmatprep.subr.mxu0 0.0
    %1586 = vmatpush1.msra.mxu0 0.0
    %1587 = vmatprep.subr.mxu0 0.0
    %1588 = vmatpush1.msra.mxu0 0.0
    %1589 = vmatprep.subr.mxu0 0.0
    %1590 = vmatpush1.msra.mxu0 0.0
    %1591 = vmatprep.subr.mxu0 0.0
    %1592 = vmatpush1.msra.mxu0 0.0
    %1593 = vmatprep.subr.mxu0 0.0
    %1594 = vmatpush1.msra.mxu0 0.0
    %1595 = vmatprep.subr.mxu0 0.0
    %1596 = vmatpush1.msra.mxu0 0.0
    %1597 = vmatprep.subr.mxu0 0.0
    %1598 = vmatpush1.msra.mxu0 0.0
    %1599 = vmatprep.mubr.f32.mxu0 0.0
    %1600 = vmatmul.mubr.f32.gmra.mrb[0].mxu0 %v1457
    %v1601 = vpop.f32.mrb[0].mxu0
    %v1602 = vadd.f32 %v452, %v1601
    %v1603 = vpop.f32.mrb[0].mxu0
    %1604 = vdwg.mxu0
    %v1605 = vadd.f32 %v1461, %v1531
    %v1606 = vxor.u32 %v1605, 2147483648
    %v1607 = vmul.f32 %v1606, 1.442695
    %v1608 = vpow.pop %v1607
    %v1609 = vadd.f32 %v1608, 1.0
    %v1610 = vrcp.pop %v1609
    %v1611 = vmul.f32 1.0, %v1610
    %v1612 = vadd.f32 %v1462, %v1533
    %v1613 = vxor.u32 %v1612, 2147483648
    %v1614 = vmul.f32 %v1613, 1.442695
    %v1615 = vpow.pop %v1614
    %v1616 = vadd.f32 %v1615, 1.0
    %v1617 = vrcp.pop %v1616
    %v1618 = vmul.f32 1.0, %v1617
    %v1619 = vmul.f32 %v1611, %v1602
    %v1620 = vadd.f32 %v1463, %v1619
    %v1621 = vtanh.pop %v1620
    %v1622 = vsub.f32 1.0, %v1618
    %v1623 = vmul.f32 %v1622, %v1621
    %v1624 = vmul.f32 %v1618, %v1457
    %v1625 = vadd.f32 %v1623, %v1624
    %s1626 = smul.u32 0, 3
    %s1627 = smul.addr %s1626, 8
    %s1628 = scalar_lea.vmem [#allocation2], %s1627
    %v1629 = vld [vmem:[%s1628] sm:$0xff]
    %v1630 = vld [vmem:[%s1628 + $0x8] sm:$0xff]
    %v1631 = vld [vmem:[%s1628 + $0x10] sm:$0xff]
    %1632 = vmatprep.subr.mxu0 %v392
    %1633 = vmatpush1.msra.mxu0 %v391
    %1634 = vmatprep.subr.mxu0 %v395
    %1635 = vmatpush1.msra.mxu0 %v394
    %1636 = vmatprep.subr.mxu0 %v398
    %1637 = vmatpush1.msra.mxu0 %v397
    %1638 = vmatprep.subr.mxu0 %v401
    %1639 = vmatpush1.msra.mxu0 %v400
    %1640 = vmatprep.subr.mxu0 %v404
    %1641 = vmatpush1.msra.mxu0 %v403
    %1642 = vmatprep.subr.mxu0 %v407
    %1643 = vmatpush1.msra.mxu0 %v406
    %1644 = vmatprep.subr.mxu0 %v410
    %1645 = vmatpush1.msra.mxu0 %v409
    %1646 = vmatprep.subr.mxu0 %v413
    %1647 = vmatpush1.msra.mxu0 %v412
    %1648 = vmatprep.subr.mxu0 %v416
    %1649 = vmatpush1.msra.mxu0 %v415
    %1650 = vmatprep.subr.mxu0 %v419
    %1651 = vmatpush1.msra.mxu0 %v418
    %1652 = vmatprep.subr.mxu0 %v422
    %1653 = vmatpush1.msra.mxu0 %v421
    %1654 = vmatprep.subr.mxu0 %v425
    %1655 = vmatpush1.msra.mxu0 %v424
    %1656 = vmatprep.subr.mxu0 %v428
    %1657 = vmatpush1.msra.mxu0 %v427
    %1658 = vmatprep.subr.mxu0 %v431
    %1659 = vmatpush1.msra.mxu0 %v430
    %1660 = vmatprep.subr.mxu0 %v434
    %1661 = vmatpush1.msra.mxu0 %v433
    %1662 = vmatprep.subr.mxu0 %v437
    %1663 = vmatpush1.msra.mxu0 %v436
    %1664 = vmatprep.subr.mxu0 0.0
    %1665 = vmatpush1.msra.mxu0 0.0
    %1666 = vmatprep.subr.mxu0 0.0
    %1667 = vmatpush1.msra.mxu0 0.0
    %1668 = vmatprep.subr.mxu0 0.0
    %1669 = vmatpush1.msra.mxu0 0.0
    %1670 = vmatprep.subr.mxu0 0.0
    %1671 = vmatpush1.msra.mxu0 0.0
    %1672 = vmatprep.subr.mxu0 0.0
    %1673 = vmatpush1.msra.mxu0 0.0
    %1674 = vmatprep.subr.mxu0 0.0
    %1675 = vmatpush1.msra.mxu0 0.0
    %1676 = vmatprep.subr.mxu0 0.0
    %1677 = vmatpush1.msra.mxu0 0.0
    %1678 = vmatprep.subr.mxu0 0.0
    %1679 = vmatpush1.msra.mxu0 0.0
    %1680 = vmatprep.subr.mxu0 0.0
    %1681 = vmatpush1.msra.mxu0 0.0
    %1682 = vmatprep.subr.mxu0 0.0
    %1683 = vmatpush1.msra.mxu0 0.0
    %1684 = vmatprep.subr.mxu0 0.0
    %1685 = vmatpush1.msra.mxu0 0.0
    %1686 = vmatprep.subr.mxu0 0.0
    %1687 = vmatpush1.msra.mxu0 0.0
    %1688 = vmatprep.subr.mxu0 0.0
    %1689 = vmatpush1.msra.mxu0 0.0
    %1690 = vmatprep.subr.mxu0 0.0
    %1691 = vmatpush1.msra.mxu0 0.0
    %1692 = vmatprep.subr.mxu0 0.0
    %1693 = vmatpush1.msra.mxu0 0.0
    %1694 = vmatprep.subr.mxu0 0.0
    %1695 = vmatpush1.msra.mxu0 0.0
    %1696 = vmatprep.mubr.f32.mxu0 0.0
    %1697 = vmatmul.mubr.f32.gmra.mrb[0].mxu0 %v1625
    %v1698 = vpop.f32.mrb[0].mxu0
    %v1699 = vadd.f32 %v444, %v1698
    %v1700 = vpop.f32.mrb[0].mxu0
    %v1701 = vadd.f32 %v448, %v1700
    %1702 = vdwg.mxu0
    %1703 = vmatprep.subr.mxu0 0.0
    %1704 = vmatpush1.msra.mxu0 %v393
    %1705 = vmatprep.subr.mxu0 0.0
    %1706 = vmatpush1.msra.mxu0 %v396
    %1707 = vmatprep.subr.mxu0 0.0
    %1708 = vmatpush1.msra.mxu0 %v399
    %1709 = vmatprep.subr.mxu0 0.0
    %1710 = vmatpush1.msra.mxu0 %v402
    %1711 = vmatprep.subr.mxu0 0.0
    %1712 = vmatpush1.msra.mxu0 %v405
    %1713 = vmatprep.subr.mxu0 0.0
    %1714 = vmatpush1.msra.mxu0 %v408
    %1715 = vmatprep.subr.mxu0 0.0
    %1716 = vmatpush1.msra.mxu0 %v411
    %1717 = vmatprep.subr.mxu0 0.0
    %1718 = vmatpush1.msra.mxu0 %v414
    %1719 = vmatprep.subr.mxu0 0.0
    %1720 = vmatpush1.msra.mxu0 %v417
    %1721 = vmatprep.subr.mxu0 0.0
    %1722 = vmatpush1.msra.mxu0 %v420
    %1723 = vmatprep.subr.mxu0 0.0
    %1724 = vmatpush1.msra.mxu0 %v423
    %1725 = vmatprep.subr.mxu0 0.0
    %1726 = vmatpush1.msra.mxu0 %v426
    %1727 = vmatprep.subr.mxu0 0.0
    %1728 = vmatpush1.msra.mxu0 %v429
    %1729 = vmatprep.subr.mxu0 0.0
    %1730 = vmatpush1.msra.mxu0 %v432
    %1731 = vmatprep.subr.mxu0 0.0
    %1732 = vmatpush1.msra.mxu0 %v435
    %1733 = vmatprep.subr.mxu0 0.0
    %1734 = vmatpush1.msra.mxu0 %v438
    %1735 = vmatprep.subr.mxu0 0.0
    %1736 = vmatpush1.msra.mxu0 0.0
    %1737 = vmatprep.subr.mxu0 0.0
    %1738 = vmatpush1.msra.mxu0 0.0
    %1739 = vmatprep.subr.mxu0 0.0
    %1740 = vmatpush1.msra.mxu0 0.0
    %1741 = vmatprep.subr.mxu0 0.0
    %1742 = vmatpush1.msra.mxu0 0.0
    %1743 = vmatprep.subr.mxu0 0.0
    %1744 = vmatpush1.msra.mxu0 0.0
    %1745 = vmatprep.subr.mxu0 0.0
    %1746 = vmatpush1.msra.mxu0 0.0
    %1747 = vmatprep.subr.mxu0 0.0
    %1748 = vmatpush1.msra.mxu0 0.0
    %1749 = vmatprep.subr.mxu0 0.0
    %1750 = vmatpush1.msra.mxu0 0.0
    %1751 = vmatprep.subr.mxu0 0.0
    %1752 = vmatpush1.msra.mxu0 0.0
    %1753 = vmatprep.subr.mxu0 0.0
    %1754 = vmatpush1.msra.mxu0 0.0
    %1755 = vmatprep.subr.mxu0 0.0
    %1756 = vmatpush1.msra.mxu0 0.0
    %1757 = vmatprep.subr.mxu0 0.0
    %1758 = vmatpush1.msra.mxu0 0.0
    %1759 = vmatprep.subr.mxu0 0.0
    %1760 = vmatpush1.msra.mxu0 0.0
    %1761 = vmatprep.subr.mxu0 0.0
    %1762 = vmatpush1.msra.mxu0 0.0
    %1763 = vmatprep.subr.mxu0 0.0
    %1764 = vmatpush1.msra.mxu0 0.0
    %1765 = vmatprep.subr.mxu0 0.0
    %1766 = vmatpush1.msra.mxu0 0.0
    %1767 = vmatprep.mubr.f32.mxu0 0.0
    %1768 = vmatmul.mubr.f32.gmra.mrb[0].mxu0 %v1625
    %v1769 = vpop.f32.mrb[0].mxu0
    %v1770 = vadd.f32 %v452, %v1769
    %v1771 = vpop.f32.mrb[0].mxu0
    %1772 = vdwg.mxu0
    %v1773 = vadd.f32 %v1629, %v1699
    %v1774 = vxor.u32 %v1773, 2147483648
    %v1775 = vmul.f32 %v1774, 1.442695
    %v1776 = vpow.pop %v1775
    %v1777 = vadd.f32 %v1776, 1.0
    %v1778 = vrcp.pop %v1777
    %v1779 = vmul.f32 1.0, %v1778
    %v1780 = vadd.f32 %v1630, %v1701
    %v1781 = vxor.u32 %v1780, 2147483648
    %v1782 = vmul.f32 %v1781, 1.442695
    %v1783 = vpow.pop %v1782
    %v1784 = vadd.f32 %v1783, 1.0
    %v1785 = vrcp.pop %v1784
    %v1786 = vmul.f32 1.0, %v1785
    %v1787 = vmul.f32 %v1779, %v1770
    %v1788 = vadd.f32 %v1631, %v1787
    %v1789 = vtanh.pop %v1788
    %v1790 = vsub.f32 1.0, %v1786
    %v1791 = vmul.f32 %v1790, %v1789
    %v1792 = vmul.f32 %v1786, %v1625
    %v1793 = vadd.f32 %v1791, %v1792
    %v1794 = vld [vmem:[#allocation6] sm:$0xff]
    %v1795 = vld [vmem:[#allocation6 + $0x8] sm:$0xff]
    %v1796 = vld [vmem:[#allocation6 + $0x10] sm:$0xff]
    %v1797 = vld [vmem:[#allocation6 + $0x18] sm:$0xff]
    %v1798 = vld [vmem:[#allocation6 + $0x20] sm:$0xff]
    %v1799 = vld [vmem:[#allocation6 + $0x28] sm:$0xff]
    %v1800 = vld [vmem:[#allocation6 + $0x30] sm:$0xff]
    %v1801 = vld [vmem:[#allocation6 + $0x38] sm:$0xff]
    %v1802 = vld [vmem:[#allocation6 + $0x40] sm:$0xff]
    %v1803 = vld [vmem:[#allocation6 + $0x48] sm:$0xff]
    %v1804 = vld [vmem:[#allocation6 + $0x50] sm:$0xff]
    %v1805 = vld [vmem:[#allocation6 + $0x58] sm:$0xff]
    %v1806 = vld [vmem:[#allocation6 + $0x60] sm:$0xff]
    %v1807 = vld [vmem:[#allocation6 + $0x68] sm:$0xff]
    %v1808 = vld [vmem:[#allocation6 + $0x70] sm:$0xff]
    %v1809 = vld [vmem:[#allocation6 + $0x78] sm:$0xff]
    %v1810 = vld [vmem:[%s6] sm:$0x1]
    %v1812 = vlaneseq
    %v1813 = vshrl.u32 %v1812, 7
    %v1814 = vsub.s32 0, %v1813
    %v1815 = vrot.slane %v1810, %v1814
    %1817 = vmatprep.subr.mxu0 0.0
    %1818 = vmatpush1.msra.mxu0 %v1794
    %1819 = vmatprep.subr.mxu0 0.0
    %1820 = vmatpush1.msra.mxu0 %v1795
    %1821 = vmatprep.subr.mxu0 0.0
    %1822 = vmatpush1.msra.mxu0 %v1796
    %1823 = vmatprep.subr.mxu0 0.0
    %1824 = vmatpush1.msra.mxu0 %v1797
    %1825 = vmatprep.subr.mxu0 0.0
    %1826 = vmatpush1.msra.mxu0 %v1798
    %1827 = vmatprep.subr.mxu0 0.0
    %1828 = vmatpush1.msra.mxu0 %v1799
    %1829 = vmatprep.subr.mxu0 0.0
    %1830 = vmatpush1.msra.mxu0 %v1800
    %1831 = vmatprep.subr.mxu0 0.0
    %1832 = vmatpush1.msra.mxu0 %v1801
    %1833 = vmatprep.subr.mxu0 0.0
    %1834 = vmatpush1.msra.mxu0 %v1802
    %1835 = vmatprep.subr.mxu0 0.0
    %1836 = vmatpush1.msra.mxu0 %v1803
    %1837 = vmatprep.subr.mxu0 0.0
    %1838 = vmatpush1.msra.mxu0 %v1804
    %1839 = vmatprep.subr.mxu0 0.0
    %1840 = vmatpush1.msra.mxu0 %v1805
    %1841 = vmatprep.subr.mxu0 0.0
    %1842 = vmatpush1.msra.mxu0 %v1806
    %1843 = vmatprep.subr.mxu0 0.0
    %1844 = vmatpush1.msra.mxu0 %v1807
    %1845 = vmatprep.subr.mxu0 0.0
    %1846 = vmatpush1.msra.mxu0 %v1808
    %1847 = vmatprep.subr.mxu0 0.0
    %1848 = vmatpush1.msra.mxu0 %v1809
    %1849 = vmatprep.subr.mxu0 0.0
    %1850 = vmatpush1.msra.mxu0 0.0
    %1851 = vmatprep.subr.mxu0 0.0
    %1852 = vmatpush1.msra.mxu0 0.0
    %1853 = vmatprep.subr.mxu0 0.0
    %1854 = vmatpush1.msra.mxu0 0.0
    %1855 = vmatprep.subr.mxu0 0.0
    %1856 = vmatpush1.msra.mxu0 0.0
    %1857 = vmatprep.subr.mxu0 0.0
    %1858 = vmatpush1.msra.mxu0 0.0
    %1859 = vmatprep.subr.mxu0 0.0
    %1860 = vmatpush1.msra.mxu0 0.0
    %1861 = vmatprep.subr.mxu0 0.0
    %1862 = vmatpush1.msra.mxu0 0.0
    %1863 = vmatprep.subr.mxu0 0.0
    %1864 = vmatpush1.msra.mxu0 0.0
    %1865 = vmatprep.subr.mxu0 0.0
    %1866 = vmatpush1.msra.mxu0 0.0
    %1867 = vmatprep.subr.mxu0 0.0
    %1868 = vmatpush1.msra.mxu0 0.0
    %1869 = vmatprep.subr.mxu0 0.0
    %1870 = vmatpush1.msra.mxu0 0.0
    %1871 = vmatprep.subr.mxu0 0.0
    %1872 = vmatpush1.msra.mxu0 0.0
    %1873 = vmatprep.subr.mxu0 0.0
    %1874 = vmatpush1.msra.mxu0 0.0
    %1875 = vmatprep.subr.mxu0 0.0
    %1876 = vmatpush1.msra.mxu0 0.0
    %1877 = vmatprep.subr.mxu0 0.0
    %1878 = vmatpush1.msra.mxu0 0.0
    %1879 = vmatprep.subr.mxu0 0.0
    %1880 = vmatpush1.msra.mxu0 0.0
    %1881 = vmatprep.mubr.f32.mxu0 0.0
    %1882 = vmatmul.mubr.f32.gmra.mrb[0].mxu0 %v1793
    %v1883 = vpop.f32.mrb[0].mxu0
    %v1884 = vadd.f32 %v1815, %v1883
    %v1885 = vpop.f32.mrb[0].mxu0
    %1886 = vdwg.mxu0
    %v1887 = vtanh.pop %v1884
    %v1888 = vld [vmem:[#allocation8] sm:$0xff]
    %v1889 = vld [vmem:[#allocation8 + $0x8] sm:$0xff]
    %v1890 = vld [vmem:[#allocation8 + $0x10] sm:$0xff]
    %v1891 = vld [vmem:[#allocation8 + $0x18] sm:$0xff]
    %v1892 = vld [vmem:[#allocation8 + $0x20] sm:$0xff]
    %v1893 = vld [vmem:[#allocation8 + $0x28] sm:$0xff]
    %v1894 = vld [vmem:[#allocation8 + $0x30] sm:$0xff]
    %v1895 = vld [vmem:[#allocation8 + $0x38] sm:$0xff]
    %v1896 = vld [vmem:[#allocation8 + $0x40] sm:$0xff]
    %v1897 = vld [vmem:[#allocation8 + $0x48] sm:$0xff]
    %v1898 = vld [vmem:[#allocation8 + $0x50] sm:$0xff]
    %v1899 = vld [vmem:[#allocation8 + $0x58] sm:$0xff]
    %v1900 = vld [vmem:[#allocation8 + $0x60] sm:$0xff]
    %v1901 = vld [vmem:[#allocation8 + $0x68] sm:$0xff]
    %v1902 = vld [vmem:[#allocation8 + $0x70] sm:$0xff]
    %v1903 = vld [vmem:[#allocation8 + $0x78] sm:$0xff]
    %v1904 = vld [vmem:[%s8] sm:$0x1]
    %v1906 = vlaneseq
    %v1907 = vshrl.u32 %v1906, 7
    %v1908 = vsub.s32 0, %v1907
    %v1909 = vrot.slane %v1904, %v1908
    %1911 = vmatprep.subr.mxu0 0.0
    %1912 = vmatpush1.msra.mxu0 %v1888
    %1913 = vmatprep.subr.mxu0 0.0
    %1914 = vmatpush1.msra.mxu0 %v1889
    %1915 = vmatprep.subr.mxu0 0.0
    %1916 = vmatpush1.msra.mxu0 %v1890
    %1917 = vmatprep.subr.mxu0 0.0
    %1918 = vmatpush1.msra.mxu0 %v1891
    %1919 = vmatprep.subr.mxu0 0.0
    %1920 = vmatpush1.msra.mxu0 %v1892
    %1921 = vmatprep.subr.mxu0 0.0
    %1922 = vmatpush1.msra.mxu0 %v1893
    %1923 = vmatprep.subr.mxu0 0.0
    %1924 = vmatpush1.msra.mxu0 %v1894
    %1925 = vmatprep.subr.mxu0 0.0
    %1926 = vmatpush1.msra.mxu0 %v1895
    %1927 = vmatprep.subr.mxu0 0.0
    %1928 = vmatpush1.msra.mxu0 %v1896
    %1929 = vmatprep.subr.mxu0 0.0
    %1930 = vmatpush1.msra.mxu0 %v1897
    %1931 = vmatprep.subr.mxu0 0.0
    %1932 = vmatpush1.msra.mxu0 %v1898
    %1933 = vmatprep.subr.mxu0 0.0
    %1934 = vmatpush1.msra.mxu0 %v1899
    %1935 = vmatprep.subr.mxu0 0.0
    %1936 = vmatpush1.msra.mxu0 %v1900
    %1937 = vmatprep.subr.mxu0 0.0
    %1938 = vmatpush1.msra.mxu0 %v1901
    %1939 = vmatprep.subr.mxu0 0.0
    %1940 = vmatpush1.msra.mxu0 %v1902
    %1941 = vmatprep.subr.mxu0 0.0
    %1942 = vmatpush1.msra.mxu0 %v1903
    %1943 = vmatprep.subr.mxu0 0.0
    %1944 = vmatpush1.msra.mxu0 0.0
    %1945 = vmatprep.subr.mxu0 0.0
    %1946 = vmatpush1.msra.mxu0 0.0
    %1947 = vmatprep.subr.mxu0 0.0
    %1948 = vmatpush1.msra.mxu0 0.0
    %1949 = vmatprep.subr.mxu0 0.0
    %1950 = vmatpush1.msra.mxu0 0.0
    %1951 = vmatprep.subr.mxu0 0.0
    %1952 = vmatpush1.msra.mxu0 0.0
    %1953 = vmatprep.subr.mxu0 0.0
    %1954 = vmatpush1.msra.mxu0 0.0
    %1955 = vmatprep.subr.mxu0 0.0
    %1956 = vmatpush1.msra.mxu0 0.0
    %1957 = vmatprep.subr.mxu0 0.0
    %1958 = vmatpush1.msra.mxu0 0.0
    %1959 = vmatprep.subr.mxu0 0.0
    %1960 = vmatpush1.msra.mxu0 0.0
    %1961 = vmatprep.subr.mxu0 0.0
    %1962 = vmatpush1.msra.mxu0 0.0
    %1963 = vmatprep.subr.mxu0 0.0
    %1964 = vmatpush1.msra.mxu0 0.0
    %1965 = vmatprep.subr.mxu0 0.0
    %1966 = vmatpush1.msra.mxu0 0.0
    %1967 = vmatprep.subr.mxu0 0.0
    %1968 = vmatpush1.msra.mxu0 0.0
    %1969 = vmatprep.subr.mxu0 0.0
    %1970 = vmatpush1.msra.mxu0 0.0
    %1971 = vmatprep.subr.mxu0 0.0
    %1972 = vmatpush1.msra.mxu0 0.0
    %1973 = vmatprep.subr.mxu0 0.0
    %1974 = vmatpush1.msra.mxu0 0.0
    %1975 = vmatprep.mubr.f32.mxu0 0.0
    %1976 = vmatmul.mubr.f32.gmra.mrb[0].mxu0 %v1887
    %v1977 = vpop.f32.mrb[0].mxu0
    %v1978 = vadd.f32 %v1909, %v1977
    %v1979 = vpop.f32.mrb[0].mxu0
    %1980 = vdwg.mxu0
    %1981 = vst [vmem:[#allocation9] sm:$0xff] %v1978
    // Predicated region
    $region50: #{tpu_custom_call.1} parent=1 // pred_check
      _
    $region51: #{tpu_custom_call.1} parent=1 // pred_check_branch
      %1983 = sbr.rel (0) target = $region53
    $region52: #{tpu_custom_call.1} parent=1 // pred_region
      %s1985 = ssub.s32 128, 128
      %1986 = vsyncadd [#allocation5], %s1985
      %s1988 = sshll.u32 [#allocation9], 4
      %s1989 = int_to_ptr.vmem [resolvable:$true] %s1988
      %1991 = dma.vmem_to_hbm [thread:$0]  %s1989, 128, %s9, [#allocation5]
    $region53: #{tpu_custom_call.1} parent=1 // pred_fallthru
      _
    // Predicated region
    $region54: #{tpu_custom_call.1} parent=1 // pred_check
      _
    $region55: #{tpu_custom_call.1} parent=1 // pred_check_branch
      %1993 = sbr.rel (0) target = $region57
    $region56: #{tpu_custom_call.1} parent=1 // pred_region
      %1994 = dma.done [#allocation5], 128
    $region57: #{tpu_custom_call.1} parent=1 // pred_fallthru
      _
    %1995 = vsyncpa [#allocation4], 1
    %1996 = vsyncpa [#allocation7], 1
    %1997 = vsyncpa [#allocation5], 1

</llo_original>
